<compile_context>
chip_gen: v7x
topology: tpu7x:2x2x1
jax: 0.10.0
libtpu: 0.0.40
codegen_flags: <defaults>
</compile_context>

<pallas_src>
import numpy as np
import jax
import jax.numpy as jnp
from jax.experimental import pallas as pl
from jax.experimental.pallas import tpu as pltpu


# ---------------------------------------------------------------------------
# small helpers (wrapper-side layout plumbing only — no FLOPs)
# ---------------------------------------------------------------------------
def _round_up(x: int, m: int) -> int:
    return (x + m - 1) // m * m


def _cdiv(a: int, b: int) -> int:
    return (a + b - 1) // b


def _batch_tile(B: int, cap: int) -> int:
    """Batch tile <= cap; keeps >= 2 grid steps when B >= 2 (2-TC chips)."""
    if B <= 1:
        return 1
    steps = max(2, _cdiv(B, cap))
    return _cdiv(B, steps)


def _pad_last(x, n):
    pad = n - x.shape[-1]
    if pad <= 0:
        return x
    cfg = [(0, 0)] * (x.ndim - 1) + [(0, pad)]
    return jnp.pad(x, cfg)


def _pad_2d(x, rows, cols):
    return jnp.pad(x, ((0, rows - x.shape[0]), (0, cols - x.shape[1])))


def _conv_weight_to_matrix(w):
    # torch conv layout (Cout, Cin, kh, kw) -> GEMM matrix (kh*kw*Cin, Cout)
    cout, cin, kh, kw = w.shape
    return jnp.transpose(w, (2, 3, 1, 0)).reshape(kh * kw * cin, cout)


def _pool_grouped_patches(x_nhwc, k):
    """im2col for a VALID kxk conv followed by a 2x2 stride-2 maxpool.

    Returns (patches, PH, PW) with patches of shape (B, 4, PH*PW, k*k*Cin):
    patches[b, q, p] is the conv-input patch of window member q = 2*dh + dw of
    pooled position p = ph*PW + pw.  Pure gathers / reshapes (no FLOPs).
    """
    B, H, W, C = x_nhwc.shape
    OH, OW = H - k + 1, W - k + 1
    PH, PW = OH // 2, OW // 2
    rows = []
    for kh in range(k):
        cols = [x_nhwc[:, kh:kh + OH, kw:kw + OW, :] for kw in range(k)]
        rows.append(jnp.stack(cols, axis=3))            # (B, OH, OW, kw, C)
    patches = jnp.stack(rows, axis=3)                   # (B, OH, OW, kh, kw, C)
    patches = patches.reshape(B, OH, OW, k * k * C)
    patches = patches[:, :2 * PH, :2 * PW, :]
    patches = patches.reshape(B, PH, 2, PW, 2, k * k * C)
    patches = jnp.transpose(patches, (0, 2, 4, 1, 3, 5))  # (B, 2, 2, PH, PW, CK)
    return patches.reshape(B, 4, PH * PW, k * k * C), PH, PW


# ---------------------------------------------------------------------------
# kernel 1: fused conv (as one GEMM) + maxpool + bias + ReLU, TILE_B imgs/step
# ---------------------------------------------------------------------------
def _conv_relu_pool_kernel(p_ref, w_ref, b_ref, o_ref):
    # p_ref: (TILE_B, 4, P, CK) bf16 im2col patches (pool members on axis 1)
    # w_ref: (CK, N)            bf16 conv weights (VMEM resident)
    # b_ref: (1, N)             f32 bias
    # o_ref: (TILE_B, P, N)     pooled + ReLU activations (lane-dense N)
    tb, q, pp, ck = p_ref.shape
    n = o_ref.shape[-1]
    # One MXU GEMM over all images and all 4 pool members (tile-aligned reshape).
    lhs = p_ref[...].reshape(tb * q * pp, ck)
    acc = jnp.dot(lhs, w_ref[...], preferred_element_type=jnp.float32)
    acc = acc.reshape(tb, q, pp, n)
    m = jnp.max(acc, axis=1)                       # 2x2 maxpool
    bias = jnp.reshape(b_ref[...], (1, 1, n))
    o_ref[...] = jnp.maximum(m + bias, 0.0).astype(o_ref.dtype)


def _conv_relu_pool(patches, w_mat, bias, *, out_dtype, tile_cap):
    """patches: (B, 4, P, CK); w_mat: (CK, Cout); bias: (Cout,).

    Returns the lane-dense padded result (B_pad, P_pad, N_pad); callers slice.
    """
    B, _, P, CK = patches.shape
    cout = w_mat.shape[1]
    ck_p = _round_up(CK, 128)     # lane-dense contraction dim
    p_p = _round_up(P, 8)         # sublane-dense rows
    n_p = _round_up(cout, 128)    # lane-dense output -> unmasked stores
    tile_b = _batch_tile(B, tile_cap)
    b_p = _round_up(B, tile_b)

    patches_p = jnp.pad(patches.astype(jnp.bfloat16),
                        ((0, b_p - B), (0, 0), (0, p_p - P), (0, ck_p - CK)))
    w_p = _pad_2d(w_mat.astype(jnp.bfloat16), ck_p, n_p)
    b_pd = _pad_last(bias.reshape(1, -1).astype(jnp.float32), n_p)

    out_isz = np.dtype(out_dtype).itemsize
    flops = 2 * b_p * 4 * p_p * ck_p * n_p
    bytes_accessed = (2 * patches_p.size + 2 * w_p.size + 4 * b_pd.size
                      + b_p * p_p * n_p * out_isz)

    out = pl.pallas_call(
        _conv_relu_pool_kernel,
        out_shape=jax.ShapeDtypeStruct((b_p, p_p, n_p), out_dtype),
        grid=(b_p // tile_b,),
        in_specs=[
            pl.BlockSpec((tile_b, 4, p_p, ck_p), lambda b: (b, 0, 0, 0)),
            pl.BlockSpec((ck_p, n_p), lambda b: (0, 0)),
            pl.BlockSpec((1, n_p), lambda b: (0, 0)),
        ],
        out_specs=pl.BlockSpec((tile_b, p_p, n_p), lambda b: (b, 0, 0)),
        compiler_params=pltpu.CompilerParams(dimension_semantics=("parallel",)),
        cost_estimate=pl.CostEstimate(flops=flops, transcendentals=0,
                                      bytes_accessed=bytes_accessed),
    )(patches_p, w_p, b_pd)
    return out


# ---------------------------------------------------------------------------
# kernel 2: fused fc1 + ReLU + fc2 + ReLU, tiled over batch
# ---------------------------------------------------------------------------
def _mlp_relu_kernel(x_ref, w1_ref, b1_ref, w2_ref, b2_ref, o_ref):
    h = jnp.maximum(
        jnp.dot(x_ref[...], w1_ref[...], preferred_element_type=jnp.float32)
        + b1_ref[...], 0.0)
    o_ref[...] = jnp.maximum(
        jnp.dot(h, w2_ref[...], preferred_element_type=jnp.float32)
        + b2_ref[...], 0.0)


def _mlp_relu_fused(x, w1_mat, b1, w2_mat, b2):
    """relu(relu(x @ w1_mat + b1) @ w2_mat + b2); w*_mat already (K, N)."""
    B, K = x.shape
    H1, H2 = w1_mat.shape[1], w2_mat.shape[1]
    k_p = _round_up(K, 128)
    h1_p = _round_up(H1, 128)
    h2_p = _round_up(H2, 128)
    tile_b = min(128, _round_up(B, 8))     # padding at most one tile
    b_p = _round_up(B, tile_b)

    x_p = jnp.pad(x.astype(jnp.float32), ((0, b_p - B), (0, k_p - K)))
    w1_p = _pad_2d(w1_mat.astype(jnp.float32), k_p, h1_p)
    b1_p = _pad_last(b1.reshape(1, -1).astype(jnp.float32), h1_p)
    w2_p = _pad_2d(w2_mat.astype(jnp.float32), h1_p, h2_p)
    b2_p = _pad_last(b2.reshape(1, -1).astype(jnp.float32), h2_p)

    flops = 2 * b_p * (k_p * h1_p + h1_p * h2_p)
    bytes_accessed = 4 * (x_p.size + w1_p.size + b1_p.size + w2_p.size
                          + b2_p.size + b_p * h2_p)

    out = pl.pallas_call(
        _mlp_relu_kernel,
        out_shape=jax.ShapeDtypeStruct((b_p, h2_p), jnp.float32),
        grid=(b_p // tile_b,),
        in_specs=[
            pl.BlockSpec((tile_b, k_p), lambda i: (i, 0)),
            pl.BlockSpec((k_p, h1_p), lambda i: (0, 0)),
            pl.BlockSpec((1, h1_p), lambda i: (0, 0)),
            pl.BlockSpec((h1_p, h2_p), lambda i: (0, 0)),
            pl.BlockSpec((1, h2_p), lambda i: (0, 0)),
        ],
        out_specs=pl.BlockSpec((tile_b, h2_p), lambda i: (i, 0)),
        compiler_params=pltpu.CompilerParams(dimension_semantics=("parallel",)),
        cost_estimate=pl.CostEstimate(flops=flops, transcendentals=0,
                                      bytes_accessed=bytes_accessed),
    )(x_p, w1_p, b1_p, w2_p, b2_p)
    return out[:B, :H2]


# ---------------------------------------------------------------------------
# full forward pass (matches SimpleCNN_header.forward)
# ---------------------------------------------------------------------------
def simple_cnn_header_forward(x, params):
    """x: (B, 3, 32, 32) NCHW float32; params in PyTorch layouts."""
    w1c, b1c, w2c, b2c, w1f, b1f, w2f, b2f = params
    B = x.shape[0]
    x_nhwc = jnp.transpose(x, (0, 2, 3, 1)).astype(jnp.bfloat16)

    # conv1 -> ReLU -> maxpool : (B,3,32,32) -> (B,14,14,6)
    p1, ph1, pw1 = _pool_grouped_patches(x_nhwc, 5)          # (B,4,196,75)
    c1 = w1c.shape[0]
    y1 = _conv_relu_pool(p1, _conv_weight_to_matrix(w1c), b1c,
                         out_dtype=jnp.bfloat16, tile_cap=8)
    f1 = y1[:B, :ph1 * pw1, :c1].reshape(B, ph1, pw1, c1)    # (B,14,14,6) bf16

    # conv2 -> ReLU -> maxpool : (B,14,14,6) -> (B,5,5,16)
    p2, ph2, pw2 = _pool_grouped_patches(f1, 5)              # (B,4,25,150)
    c2 = w2c.shape[0]
    y2 = _conv_relu_pool(p2, _conv_weight_to_matrix(w2c), b2c,
                         out_dtype=jnp.float32, tile_cap=32)
    f2 = y2[:B, :ph2 * pw2, :c2]                             # (B,25,16) HWC order

    # flatten: instead of relayouting activations to torch's NCHW view order,
    # fold the (c,h,w)->(h,w,c) index permutation into fc1's weight rows.
    npos = ph2 * pw2
    flat = f2.reshape(B, npos * c2)                          # (B,400) HWC order
    perm = (np.arange(c2)[None, :] * npos
            + np.arange(npos)[:, None]).reshape(-1)          # hwc idx -> torch idx
    w1_mat = jnp.transpose(w1f)[perm]                        # (400,120), HWC rows
    w2_mat = jnp.transpose(w2f)

    # fc1 -> ReLU -> fc2 -> ReLU (single fused kernel)
    return _mlp_relu_fused(flat, w1_mat, b1f, w2_mat, b2f)


# ---------------------------------------------------------------------------
# pure NumPy (float64) reference mirroring the PyTorch module exactly
# ---------------------------------------------------------------------------
def _ref_forward_numpy(x, params):
    x = np.asarray(x, np.float64)
    w1c, b1c, w2c, b2c, w1f, b1f, w2f, b2f = [np.asarray(p, np.float64)
                                              for p in params]

    def conv(v, w, b):
        B, C, H, W = v.shape
        O, _, K, _ = w.shape
        OH, OW = H - K + 1, W - K + 1
        out = np.zeros((B, O, OH, OW), dtype=np.float64)
        for kh in range(K):
            for kw in range(K):
                out += np.einsum("bchw,oc->bohw",
                                 v[:, :, kh:kh + OH, kw:kw + OW], w[:, :, kh, kw])
        return out + b[None, :, None, None]

    def pool(v):
        B, C, H, W = v.shape
        v = v[:, :, :H // 2 * 2, :W // 2 * 2].reshape(B, C, H // 2, 2, W // 2, 2)
        return v.max(axis=(3, 5))

    relu = lambda v: np.maximum(v, 0.0)
    h = pool(relu(conv(x, w1c, b1c)))
    h = pool(relu(conv(h, w2c, b2c)))
    h = h.reshape(h.shape[0], -1)
    h = relu(h @ w1f.T + b1f)
    h = relu(h @ w2f.T + b2f)
    return h


if __name__ == "__main__":
    # The hard-coded view(-1, 16*5*5) in the module implies 32x32x3 inputs.
    batch = 2
    hidden_dims = (120, 84)
    input_dim = 16 * 5 * 5

    key = jax.random.PRNGKey(0)
    ks = jax.random.split(key, 9)

    def uniform_init(k, shape, fan_in):
        bound = 1.0 / np.sqrt(fan_in)
        return jax.random.uniform(k, shape, minval=-bound, maxval=bound,
                                  dtype=jnp.float32)

    x = jax.random.normal(ks[0], (batch, 3, 32, 32), dtype=jnp.float32)
    w1c = uniform_init(ks[1], (6, 3, 5, 5), 3 * 5 * 5)
    b1c = uniform_init(ks[2], (6,), 3 * 5 * 5)
    w2c = uniform_init(ks[3], (16, 6, 5, 5), 6 * 5 * 5)
    b2c = uniform_init(ks[4], (16,), 6 * 5 * 5)
    w1f = uniform_init(ks[5], (hidden_dims[0], input_dim), input_dim)
    b1f = uniform_init(ks[6], (hidden_dims[0],), input_dim)
    w2f = uniform_init(ks[7], (hidden_dims[1], hidden_dims[0]), hidden_dims[0])
    b2f = uniform_init(ks[8], (hidden_dims[1],), hidden_dims[0])
    params = (w1c, b1c, w2c, b2c, w1f, b1f, w2f, b2f)

    fwd = jax.jit(simple_cnn_header_forward)
    out = jax.block_until_ready(fwd(x, params))
    assert out.shape == (batch, hidden_dims[1])

    ref = _ref_forward_numpy(np.asarray(x), [np.asarray(p) for p in params])
    np.testing.assert_allclose(np.asarray(out), ref, rtol=2e-2, atol=5e-3)
    print("KERNEL_OK")
</pallas_src>

<mosaic_0001>
module attributes {stable_mosaic.version = 11 : i64} {
  func.func @_conv_relu_pool_kernel(%arg0: i32, %arg1: memref<1x4x200x128xbf16, #tpu.memory_space<vmem>>, %arg2: memref<128x128xbf16, #tpu.memory_space<vmem>>, %arg3: memref<1x128xf32, #tpu.memory_space<vmem>>, %arg4: memref<1x200x128xbf16, #tpu.memory_space<vmem>>) attributes {dimension_semantics = [#tpu.dimension_semantics<parallel>], iteration_bounds = array<i64: 2>, scalar_prefetch = 0 : i64, scratch_operands = 0 : i64, tpu.core_type = #tpu.core_type<tc>, window_params = [{transform_indices = @transform_0, window_bounds = array<i64: 1, 4, 200, 128>}, {pipeline_mode = #tpu.pipeline_mode<synchronous>, transform_indices = @transform_1, window_bounds = array<i64: 128, 128>}, {pipeline_mode = #tpu.pipeline_mode<synchronous>, transform_indices = @transform_2, window_bounds = array<i64: 1, 128>}, {transform_indices = @transform_3, window_bounds = array<i64: 1, 200, 128>}]} {
    %c0 = arith.constant 0 : index
    %c0_0 = arith.constant 0 : index
    %c0_1 = arith.constant 0 : index
    %c0_2 = arith.constant 0 : index
    %0 = vector.load %arg1[%c0, %c0_0, %c0_1, %c0_2] : memref<1x4x200x128xbf16, #tpu.memory_space<vmem>>, vector<1x4x200x128xbf16>
    %1 = vector.shape_cast %0 : vector<1x4x200x128xbf16> to vector<800x128xbf16>
    %c0_3 = arith.constant 0 : index
    %c0_4 = arith.constant 0 : index
    %2 = vector.load %arg2[%c0_3, %c0_4] : memref<128x128xbf16, #tpu.memory_space<vmem>>, vector<128x128xbf16>
    %cst = arith.constant dense<0.000000e+00> : vector<800x128xf32>
    %3 = tpu.matmul %1, %2, %cst {dimension_numbers = #tpu.dot_dimension_numbers<[1], [0], [0], [1], [0, 0, 1, 1], [], []>} : vector<800x128xbf16>, vector<128x128xbf16>, vector<800x128xf32> -> vector<800x128xf32>
    %4 = vector.shape_cast %3 : vector<800x128xf32> to vector<1x4x200x128xf32>
    %cst_5 = arith.constant dense<0xFF800000> : vector<1x200x128xf32>
    %5 = vector.multi_reduction <maximumf>, %4, %cst_5 [1] : vector<1x4x200x128xf32> to vector<1x200x128xf32>
    %c0_6 = arith.constant 0 : index
    %c0_7 = arith.constant 0 : index
    %6 = vector.load %arg3[%c0_6, %c0_7] : memref<1x128xf32, #tpu.memory_space<vmem>>, vector<1x128xf32>
    %7 = vector.shape_cast %6 : vector<1x128xf32> to vector<1x1x128xf32>
    %8 = vector.broadcast %7 : vector<1x1x128xf32> to vector<1x200x128xf32>
    %9 = arith.addf %5, %8 : vector<1x200x128xf32>
    %cst_8 = arith.constant 0.000000e+00 : f32
    %10 = vector.broadcast %cst_8 : f32 to vector<1x200x128xf32>
    %11 = arith.maximumf %9, %10 : vector<1x200x128xf32>
    %12 = arith.truncf %11 : vector<1x200x128xf32> to vector<1x200x128xbf16>
    %c0_9 = arith.constant 0 : index
    %c0_10 = arith.constant 0 : index
    %c0_11 = arith.constant 0 : index
    %13 = vector.load %arg4[%c0_9, %c0_10, %c0_11] : memref<1x200x128xbf16, #tpu.memory_space<vmem>>, vector<1x200x128xbf16>
    tpu.vector_store %arg4[%c0_9, %c0_10, %c0_11], %12 {strides = array<i32>} : memref<1x200x128xbf16, #tpu.memory_space<vmem>>, vector<1x200x128xbf16>,
    return
  }
  func.func @transform_0(%arg0: i32) -> (i32, i32, i32, i32) {
    %c0_i32 = arith.constant 0 : i32
    %c0_i32_0 = arith.constant 0 : i32
    %c0_i32_1 = arith.constant 0 : i32
    %c0_i32_2 = arith.constant 0 : i32
    return %arg0, %c0_i32, %c0_i32_0, %c0_i32_1 : i32, i32, i32, i32
  }
  func.func @transform_1(%arg0: i32) -> (i32, i32) {
    %c0_i32 = arith.constant 0 : i32
    %c0_i32_0 = arith.constant 0 : i32
    %c0_i32_1 = arith.constant 0 : i32
    return %c0_i32, %c0_i32_0 : i32, i32
  }
  func.func @transform_2(%arg0: i32) -> (i32, i32) {
    %c0_i32 = arith.constant 0 : i32
    %c0_i32_0 = arith.constant 0 : i32
    %c0_i32_1 = arith.constant 0 : i32
    return %c0_i32, %c0_i32_0 : i32, i32
  }
  func.func @transform_3(%arg0: i32) -> (i32, i32, i32) {
    %c0_i32 = arith.constant 0 : i32
    %c0_i32_0 = arith.constant 0 : i32
    %c0_i32_1 = arith.constant 0 : i32
    return %arg0, %c0_i32, %c0_i32_0 : i32, i32, i32
  }
}

module attributes {stable_mosaic.version = 11 : i64} {
  func.func @_conv_relu_pool_kernel(%arg0: i32, %arg1: memref<1x4x32x256xbf16, #tpu.memory_space<vmem>>, %arg2: memref<256x128xbf16, #tpu.memory_space<vmem>>, %arg3: memref<1x128xf32, #tpu.memory_space<vmem>>, %arg4: memref<1x32x128xf32, #tpu.memory_space<vmem>>) attributes {dimension_semantics = [#tpu.dimension_semantics<parallel>], iteration_bounds = array<i64: 2>, scalar_prefetch = 0 : i64, scratch_operands = 0 : i64, tpu.core_type = #tpu.core_type<tc>, window_params = [{transform_indices = @transform_0, window_bounds = array<i64: 1, 4, 32, 256>}, {pipeline_mode = #tpu.pipeline_mode<synchronous>, transform_indices = @transform_1, window_bounds = array<i64: 256, 128>}, {pipeline_mode = #tpu.pipeline_mode<synchronous>, transform_indices = @transform_2, window_bounds = array<i64: 1, 128>}, {transform_indices = @transform_3, window_bounds = array<i64: 1, 32, 128>}]} {
    %c0 = arith.constant 0 : index
    %c0_0 = arith.constant 0 : index
    %c0_1 = arith.constant 0 : index
    %c0_2 = arith.constant 0 : index
    %0 = vector.load %arg1[%c0, %c0_0, %c0_1, %c0_2] : memref<1x4x32x256xbf16, #tpu.memory_space<vmem>>, vector<1x4x32x256xbf16>
    %1 = vector.shape_cast %0 : vector<1x4x32x256xbf16> to vector<128x256xbf16>
    %c0_3 = arith.constant 0 : index
    %c0_4 = arith.constant 0 : index
    %2 = vector.load %arg2[%c0_3, %c0_4] : memref<256x128xbf16, #tpu.memory_space<vmem>>, vector<256x128xbf16>
    %cst = arith.constant dense<0.000000e+00> : vector<128x128xf32>
    %3 = tpu.matmul %1, %2, %cst {dimension_numbers = #tpu.dot_dimension_numbers<[1], [0], [0], [1], [0, 0, 1, 1], [], []>} : vector<128x256xbf16>, vector<256x128xbf16>, vector<128x128xf32> -> vector<128x128xf32>
    %4 = vector.shape_cast %3 : vector<128x128xf32> to vector<1x4x32x128xf32>
    %cst_5 = arith.constant dense<0xFF800000> : vector<1x32x128xf32>
    %5 = vector.multi_reduction <maximumf>, %4, %cst_5 [1] : vector<1x4x32x128xf32> to vector<1x32x128xf32>
    %c0_6 = arith.constant 0 : index
    %c0_7 = arith.constant 0 : index
    %6 = vector.load %arg3[%c0_6, %c0_7] : memref<1x128xf32, #tpu.memory_space<vmem>>, vector<1x128xf32>
    %7 = vector.shape_cast %6 : vector<1x128xf32> to vector<1x1x128xf32>
    %8 = vector.broadcast %7 : vector<1x1x128xf32> to vector<1x32x128xf32>
    %9 = arith.addf %5, %8 : vector<1x32x128xf32>
    %cst_8 = arith.constant 0.000000e+00 : f32
    %10 = vector.broadcast %cst_8 : f32 to vector<1x32x128xf32>
    %11 = arith.maximumf %9, %10 : vector<1x32x128xf32>
    %c0_9 = arith.constant 0 : index
    %c0_10 = arith.constant 0 : index
    %c0_11 = arith.constant 0 : index
    %12 = vector.load %arg4[%c0_9, %c0_10, %c0_11] : memref<1x32x128xf32, #tpu.memory_space<vmem>>, vector<1x32x128xf32>
    tpu.vector_store %arg4[%c0_9, %c0_10, %c0_11], %11 {strides = array<i32>} : memref<1x32x128xf32, #tpu.memory_space<vmem>>, vector<1x32x128xf32>,
    return
  }
  func.func @transform_0(%arg0: i32) -> (i32, i32, i32, i32) {
    %c0_i32 = arith.constant 0 : i32
    %c0_i32_0 = arith.constant 0 : i32
    %c0_i32_1 = arith.constant 0 : i32
    %c0_i32_2 = arith.constant 0 : i32
    return %arg0, %c0_i32, %c0_i32_0, %c0_i32_1 : i32, i32, i32, i32
  }
  func.func @transform_1(%arg0: i32) -> (i32, i32) {
    %c0_i32 = arith.constant 0 : i32
    %c0_i32_0 = arith.constant 0 : i32
    %c0_i32_1 = arith.constant 0 : i32
    return %c0_i32, %c0_i32_0 : i32, i32
  }
  func.func @transform_2(%arg0: i32) -> (i32, i32) {
    %c0_i32 = arith.constant 0 : i32
    %c0_i32_0 = arith.constant 0 : i32
    %c0_i32_1 = arith.constant 0 : i32
    return %c0_i32, %c0_i32_0 : i32, i32
  }
  func.func @transform_3(%arg0: i32) -> (i32, i32, i32) {
    %c0_i32 = arith.constant 0 : i32
    %c0_i32_0 = arith.constant 0 : i32
    %c0_i32_1 = arith.constant 0 : i32
    return %arg0, %c0_i32, %c0_i32_0 : i32, i32, i32
  }
}

module attributes {stable_mosaic.version = 11 : i64} {
  func.func @_mlp_relu_kernel(%arg0: i32, %arg1: memref<8x512xf32, #tpu.memory_space<vmem>>, %arg2: memref<512x128xf32, #tpu.memory_space<vmem>>, %arg3: memref<1x128xf32, #tpu.memory_space<vmem>>, %arg4: memref<128x128xf32, #tpu.memory_space<vmem>>, %arg5: memref<1x128xf32, #tpu.memory_space<vmem>>, %arg6: memref<8x128xf32, #tpu.memory_space<vmem>>) attributes {dimension_semantics = [#tpu.dimension_semantics<parallel>], iteration_bounds = array<i64: 1>, scalar_prefetch = 0 : i64, scratch_operands = 0 : i64, tpu.core_type = #tpu.core_type<tc>, window_params = [{transform_indices = @transform_0, window_bounds = array<i64: 8, 512>}, {pipeline_mode = #tpu.pipeline_mode<synchronous>, transform_indices = @transform_1, window_bounds = array<i64: 512, 128>}, {pipeline_mode = #tpu.pipeline_mode<synchronous>, transform_indices = @transform_2, window_bounds = array<i64: 1, 128>}, {pipeline_mode = #tpu.pipeline_mode<synchronous>, transform_indices = @transform_3, window_bounds = array<i64: 128, 128>}, {pipeline_mode = #tpu.pipeline_mode<synchronous>, transform_indices = @transform_4, window_bounds = array<i64: 1, 128>}, {transform_indices = @transform_5, window_bounds = array<i64: 8, 128>}]} {
    %c0 = arith.constant 0 : index
    %c0_0 = arith.constant 0 : index
    %0 = vector.load %arg1[%c0, %c0_0] : memref<8x512xf32, #tpu.memory_space<vmem>>, vector<8x512xf32>
    %c0_1 = arith.constant 0 : index
    %c0_2 = arith.constant 0 : index
    %1 = vector.load %arg2[%c0_1, %c0_2] : memref<512x128xf32, #tpu.memory_space<vmem>>, vector<512x128xf32>
    %cst = arith.constant dense<0.000000e+00> : vector<8x128xf32>
    %2 = tpu.matmul %0, %1, %cst {dimension_numbers = #tpu.dot_dimension_numbers<[1], [0], [0], [1], [0, 0, 1, 1], [], []>} : vector<8x512xf32>, vector<512x128xf32>, vector<8x128xf32> -> vector<8x128xf32>
    %c0_3 = arith.constant 0 : index
    %c0_4 = arith.constant 0 : index
    %3 = vector.load %arg3[%c0_3, %c0_4] : memref<1x128xf32, #tpu.memory_space<vmem>>, vector<1x128xf32>
    %4 = vector.broadcast %3 : vector<1x128xf32> to vector<8x128xf32>
    %5 = arith.addf %2, %4 : vector<8x128xf32>
    %cst_5 = arith.constant 0.000000e+00 : f32
    %6 = vector.broadcast %cst_5 : f32 to vector<8x128xf32>
    %7 = arith.maximumf %5, %6 : vector<8x128xf32>
    %c0_6 = arith.constant 0 : index
    %c0_7 = arith.constant 0 : index
    %8 = vector.load %arg4[%c0_6, %c0_7] : memref<128x128xf32, #tpu.memory_space<vmem>>, vector<128x128xf32>
    %cst_8 = arith.constant dense<0.000000e+00> : vector<8x128xf32>
    %9 = tpu.matmul %7, %8, %cst_8 {dimension_numbers = #tpu.dot_dimension_numbers<[1], [0], [0], [1], [0, 0, 1, 1], [], []>} : vector<8x128xf32>, vector<128x128xf32>, vector<8x128xf32> -> vector<8x128xf32>
    %c0_9 = arith.constant 0 : index
    %c0_10 = arith.constant 0 : index
    %10 = vector.load %arg5[%c0_9, %c0_10] : memref<1x128xf32, #tpu.memory_space<vmem>>, vector<1x128xf32>
    %11 = vector.broadcast %10 : vector<1x128xf32> to vector<8x128xf32>
    %12 = arith.addf %9, %11 : vector<8x128xf32>
    %cst_11 = arith.constant 0.000000e+00 : f32
    %13 = vector.broadcast %cst_11 : f32 to vector<8x128xf32>
    %14 = arith.maximumf %12, %13 : vector<8x128xf32>
    %c0_12 = arith.constant 0 : index
    %c0_13 = arith.constant 0 : index
    %15 = vector.load %arg6[%c0_12, %c0_13] : memref<8x128xf32, #tpu.memory_space<vmem>>, vector<8x128xf32>
    tpu.vector_store %arg6[%c0_12, %c0_13], %14 {strides = array<i32>} : memref<8x128xf32, #tpu.memory_space<vmem>>, vector<8x128xf32>,
    return
  }
  func.func @transform_0(%arg0: i32) -> (i32, i32) {
    %c0_i32 = arith.constant 0 : i32
    %c0_i32_0 = arith.constant 0 : i32
    return %arg0, %c0_i32 : i32, i32
  }
  func.func @transform_1(%arg0: i32) -> (i32, i32) {
    %c0_i32 = arith.constant 0 : i32
    %c0_i32_0 = arith.constant 0 : i32
    %c0_i32_1 = arith.constant 0 : i32
    return %c0_i32, %c0_i32_0 : i32, i32
  }
  func.func @transform_2(%arg0: i32) -> (i32, i32) {
    %c0_i32 = arith.constant 0 : i32
    %c0_i32_0 = arith.constant 0 : i32
    %c0_i32_1 = arith.constant 0 : i32
    return %c0_i32, %c0_i32_0 : i32, i32
  }
  func.func @transform_3(%arg0: i32) -> (i32, i32) {
    %c0_i32 = arith.constant 0 : i32
    %c0_i32_0 = arith.constant 0 : i32
    %c0_i32_1 = arith.constant 0 : i32
    return %c0_i32, %c0_i32_0 : i32, i32
  }
  func.func @transform_4(%arg0: i32) -> (i32, i32) {
    %c0_i32 = arith.constant 0 : i32
    %c0_i32_0 = arith.constant 0 : i32
    %c0_i32_1 = arith.constant 0 : i32
    return %c0_i32, %c0_i32_0 : i32, i32
  }
  func.func @transform_5(%arg0: i32) -> (i32, i32) {
    %c0_i32 = arith.constant 0 : i32
    %c0_i32_0 = arith.constant 0 : i32
    return %arg0, %c0_i32 : i32, i32
  }
}

</mosaic_0001>

<llo_original>
// kernel: simple_cnn_header_forward.3
$region0: #{simple_cnn_header_forward.3}
  #allocation0 [shape = 'u32[]', space=smem, size = 0x4, offset = 0x4, fixed_abs, tag = 'smem constant byte address 0x4 - core index']
  #allocation1 [shape = 'u32[144,128]{1,0:T(1,128)}', space=vmem, size = 0x12000, scoped, tag = 'internal scratch']
  %s0 = inlined_call_operand.vmem [shape: bf16[2,4,200,128], index: 0, kind: input, shape index: {}]
  %s1 = inlined_call_operand.vmem [shape: bf16[128,128], index: 1, kind: input, shape index: {}]
  %s2 = inlined_call_operand.vmem [shape: f32[1,128], index: 2, kind: input, shape index: {}]
  %s3 = inlined_call_operand.vmem [shape: bf16[2,200,128], index: 3, kind: output, shape index: {}]
  %s4 = sld [smem:[#allocation0]]
  $region45: #{simple_cnn_header_forward.3} parent=0
    _
  %s6 = ssub.s32 1, %s4
  %s7 = scalar_select 0, %s6, %s4
  loop: start=0, step=1, limit=4
  $region2: #{simple_cnn_header_forward.3} parent=0 // loop_pre_header
    _
  $region3: #{simple_cnn_header_forward.3} parent=0 // loop_header
    %s9 = sphi 0, %s13
    %p10 = scmp.ge.s32.totalorder %s9, 4
    %s19 = sphi 0, %s21
    %s22 = sphi 0, %s19
    %s23 = sphi 0, %s22
    %s39 = sphi 0, %s23
    %s43 = sphi 0, %s43
    %s45 = sphi 0, %s43
    %s46 = sphi 0, %s45
    %s60 = sphi 0, %s46
    %s64 = sphi 0, %s64
    %s66 = sphi 0, %s64
    %s67 = sphi 0, %s66
    %s81 = sphi 0, %s67
    %s87 = sphi 0, %s89
    %s90 = sphi 0, %s87
    %s91 = sphi 0, %s90
    %s107 = sphi 0, %s91
  $region4: #{simple_cnn_header_forward.3} parent=0 // loop_header_branch
    %12 = sbr.rel (%p10) target = $region8
  $region5: #{simple_cnn_header_forward.3} parent=0 // loop_body
    %s14 = ssub.s32 %s9, 1
    %s15 = ssub.s32 %s9, 2
    %s16 = sadd.s32 %s9, 1
    %s17 = ssub.s32 %s9, %s16
    %p18 = scmp.eq.s32.totalorder %s17, 0
    %s20 = sadd.s32 %s19, 1
    %s21 = scalar_select %p18, %s19, %s20
    %p24 = pneg %p18
    %p25 = scmp.eq.s32.totalorder %s9, 1
    %p26 = por %p24, %p25
    %p27 = scmp.ne.s32.totalorder %s19, %s22
    %p28 = scmp.eq.s32.totalorder %s9, 0
    %p29 = por %p27, %p28
    %p30 = scmp.ne.s32.totalorder %s19, %s22
    %p31 = scmp.eq.s32.totalorder %s14, 1
    %p32 = por %p30, %p31
    %p33 = scmp.ne.s32.totalorder %s22, %s23
    %p34 = scmp.eq.s32.totalorder %s14, 0
    %p35 = por %p33, %p34
    %p36 = scmp.ne.s32.totalorder %s22, %s23
    %p37 = scmp.eq.s32.totalorder %s15, 1
    %p38 = por %p36, %p37
    %p40 = scmp.ne.s32.totalorder %s23, %s39
    %p41 = scmp.eq.s32.totalorder %s15, 0
    %p42 = por %p40, %p41
    %s44 = sadd.s32 %s43, 1
    %p47 = scmp.eq.s32.totalorder %s9, 1
    %p48 = scmp.ne.s32.totalorder %s43, %s45
    %p49 = scmp.eq.s32.totalorder %s9, 0
    %p50 = por %p48, %p49
    %p51 = scmp.ne.s32.totalorder %s43, %s45
    %p52 = scmp.eq.s32.totalorder %s14, 1
    %p53 = por %p51, %p52
    %p54 = scmp.ne.s32.totalorder %s45, %s46
    %p55 = scmp.eq.s32.totalorder %s14, 0
    %p56 = por %p54, %p55
    %p57 = scmp.ne.s32.totalorder %s45, %s46
    %p58 = scmp.eq.s32.totalorder %s15, 1
    %p59 = por %p57, %p58
    %p61 = scmp.ne.s32.totalorder %s46, %s60
    %p62 = scmp.eq.s32.totalorder %s15, 0
    %p63 = por %p61, %p62
    %s65 = sadd.s32 %s64, 1
    %p68 = scmp.eq.s32.totalorder %s9, 1
    %p69 = scmp.ne.s32.totalorder %s64, %s66
    %p70 = scmp.eq.s32.totalorder %s9, 0
    %p71 = por %p69, %p70
    %p72 = scmp.ne.s32.totalorder %s64, %s66
    %p73 = scmp.eq.s32.totalorder %s14, 1
    %p74 = por %p72, %p73
    %p75 = scmp.ne.s32.totalorder %s66, %s67
    %p76 = scmp.eq.s32.totalorder %s14, 0
    %p77 = por %p75, %p76
    %p78 = scmp.ne.s32.totalorder %s66, %s67
    %p79 = scmp.eq.s32.totalorder %s15, 1
    %p80 = por %p78, %p79
    %p82 = scmp.ne.s32.totalorder %s67, %s81
    %p83 = scmp.eq.s32.totalorder %s15, 0
    %p84 = por %p82, %p83
    %s85 = ssub.s32 %s9, %s16
    %p86 = scmp.eq.s32.totalorder %s85, 0
    %s88 = sadd.s32 %s87, 1
    %s89 = scalar_select %p86, %s87, %s88
    %p92 = pneg %p86
    %p93 = scmp.eq.s32.totalorder %s9, 1
    %p94 = por %p92, %p93
    %p95 = scmp.ne.s32.totalorder %s87, %s90
    %p96 = scmp.eq.s32.totalorder %s9, 0
    %p97 = por %p95, %p96
    %p98 = scmp.ne.s32.totalorder %s87, %s90
    %p99 = scmp.eq.s32.totalorder %s14, 1
    %p100 = por %p98, %p99
    %p101 = scmp.ne.s32.totalorder %s90, %s91
    %p102 = scmp.eq.s32.totalorder %s14, 0
    %p103 = por %p101, %p102
    %p104 = scmp.ne.s32.totalorder %s90, %s91
    %p105 = scmp.eq.s32.totalorder %s15, 1
    %p106 = por %p104, %p105
    %p108 = scmp.ne.s32.totalorder %s91, %s107
    %p109 = scmp.eq.s32.totalorder %s15, 0
    %p110 = por %p108, %p109
    %p111 = scmp.le.s32.totalorder 1, %s9
    %p112 = scmp.lt.s32.totalorder %s9, 3
    %p113 = pnand %p111, %p112
    %p114 = pneg %p113
    // Predicated region
    $region9: #{simple_cnn_header_forward.3} parent=5 // pred_check
      _
    $region10: #{simple_cnn_header_forward.3} parent=5 // pred_check_branch
      %116 = sbr.rel (%p113) target = $region12
    $region11: #{simple_cnn_header_forward.3} parent=5 // pred_region
      %s117 = ssub.s32 %s9, 1
      // Predicated region
      $region13: #{simple_cnn_header_forward.3} parent=11 // pred_check
        %p118 = pneg %p56
      $region14: #{simple_cnn_header_forward.3} parent=11 // pred_check_branch
        %120 = sbr.rel (%p118) target = $region16
      $region15: #{simple_cnn_header_forward.3} parent=11 // pred_region
        _
      $region16: #{simple_cnn_header_forward.3} parent=11 // pred_fallthru
        _
      // Predicated region
      $region17: #{simple_cnn_header_forward.3} parent=11 // pred_check
        %p121 = pneg %p77
      $region18: #{simple_cnn_header_forward.3} parent=11 // pred_check_branch
        %123 = sbr.rel (%p121) target = $region20
      $region19: #{simple_cnn_header_forward.3} parent=11 // pred_region
        _
      $region20: #{simple_cnn_header_forward.3} parent=11 // pred_fallthru
        _
    $region12: #{simple_cnn_header_forward.3} parent=5 // pred_fallthru
      _
    %p124 = scmp.lt.s32.totalorder %s9, 2
    // Predicated region
    $region21: #{simple_cnn_header_forward.3} parent=5 // pred_check
      %p125 = pneg %p124
    $region22: #{simple_cnn_header_forward.3} parent=5 // pred_check_branch
      %127 = sbr.rel (%p125) target = $region24
    $region23: #{simple_cnn_header_forward.3} parent=5 // pred_region
      // Predicated region
      $region25: #{simple_cnn_header_forward.3} parent=23 // pred_check
        %p128 = pneg %p29
      $region26: #{simple_cnn_header_forward.3} parent=23 // pred_check_branch
        %130 = sbr.rel (%p128) target = $region28
      $region27: #{simple_cnn_header_forward.3} parent=23 // pred_region
        %p131 = scmp.lt.s32.totalorder %s9, 1
        %s132 = scalar_select %p131, %s9, 1
        %s133 = smul.addr %s132, 100
        %s134 = smul.addr %s133, 4
        %s135 = scalar_lea.vmem %s0, %s134
      $region28: #{simple_cnn_header_forward.3} parent=23 // pred_fallthru
        _
    $region24: #{simple_cnn_header_forward.3} parent=5 // pred_fallthru
      _
    %p136 = scmp.le.s32.totalorder 1, %s9
    %p137 = scmp.lt.s32.totalorder %s9, 3
    %p138 = pnand %p136, %p137
    %p139 = pneg %p138
    // Predicated region
    $region29: #{simple_cnn_header_forward.3} parent=5 // pred_check
      _
    $region30: #{simple_cnn_header_forward.3} parent=5 // pred_check_branch
      %141 = sbr.rel (%p138) target = $region32
    $region31: #{simple_cnn_header_forward.3} parent=5 // pred_region
      %s142 = ssub.s32 %s9, 1
      %p143 = scmp.lt.s32.totalorder %s14, 1
      %s144 = scalar_select %p143, %s14, 1
      %s145 = smul.addr %s144, 100
      %s146 = smul.addr %s145, 4
      %s147 = scalar_lea.vmem %s0, %s146
      %p148 = pneg %p35
      %p149 = pneg %p32
      %p150 = pneg %p56
      %p151 = pneg %p53
      %p152 = pneg %p77
      %p153 = pneg %p74
      %p154 = pneg %p103
      %p155 = pneg %p100
      %p156 = scmp.lt.s32.totalorder %s14, 1
      %s157 = scalar_select %p156, %s14, 1
      %s158 = smul.addr %s157, 25
      %s159 = smul.addr %s158, 4
      %s160 = scalar_lea.vmem %s3, %s159
      %p161 = scmp.lt.s32.totalorder %s14, 1
      %s162 = scalar_select %p161, %s14, 1
      %s163 = smul.addr %s162, 100
      %s164 = smul.addr %s163, 4
      %s165 = scalar_lea.vmem %s0, %s164
      %p166 = scmp.lt.s32.totalorder %s14, 1
      %s167 = scalar_select %p166, %s14, 1
      %s168 = smul.addr %s167, 25
      %s169 = smul.addr %s168, 4
      %s170 = scalar_lea.vmem %s3, %s169
      %v172 = vld [vmem:[%s165] sm:$0xf]
      %v173 = vld [vmem:[%s165 + $0x4] sm:$0xf]
      %v174 = vld [vmem:[%s165 + $0x8] sm:$0xf]
      %v175 = vld [vmem:[%s165 + $0xc] sm:$0xf]
      %v176 = vld [vmem:[%s165 + $0x10] sm:$0xf]
      %v177 = vld [vmem:[%s165 + $0x14] sm:$0xf]
      %v178 = vld [vmem:[%s165 + $0x18] sm:$0xf]
      %v179 = vld [vmem:[%s165 + $0x1c] sm:$0xf]
      %v180 = vld [vmem:[%s165 + $0x20] sm:$0xf]
      %v181 = vld [vmem:[%s165 + $0x24] sm:$0xf]
      %v182 = vld [vmem:[%s165 + $0x28] sm:$0xf]
      %v183 = vld [vmem:[%s165 + $0x2c] sm:$0xf]
      %v184 = vld [vmem:[%s165 + $0x30] sm:$0xf]
      %v185 = vld [vmem:[%s165 + $0x34] sm:$0xf]
      %v186 = vld [vmem:[%s165 + $0x38] sm:$0xf]
      %v187 = vld [vmem:[%s165 + $0x3c] sm:$0xf]
      %v188 = vld [vmem:[%s165 + $0x40] sm:$0xf]
      %v189 = vld [vmem:[%s165 + $0x44] sm:$0xf]
      %v190 = vld [vmem:[%s165 + $0x48] sm:$0xf]
      %v191 = vld [vmem:[%s165 + $0x4c] sm:$0xf]
      %v192 = vld [vmem:[%s165 + $0x50] sm:$0xf]
      %v193 = vld [vmem:[%s165 + $0x54] sm:$0xf]
      %v194 = vld [vmem:[%s165 + $0x58] sm:$0xf]
      %v195 = vld [vmem:[%s165 + $0x5c] sm:$0xf]
      %v196 = vld [vmem:[%s165 + $0x60] sm:$0xf]
      %v197 = vld [vmem:[%s165 + $0x64] sm:$0xf]
      %v198 = vld [vmem:[%s165 + $0x68] sm:$0xf]
      %v199 = vld [vmem:[%s165 + $0x6c] sm:$0xf]
      %v200 = vld [vmem:[%s165 + $0x70] sm:$0xf]
      %v201 = vld [vmem:[%s165 + $0x74] sm:$0xf]
      %v202 = vld [vmem:[%s165 + $0x78] sm:$0xf]
      %v203 = vld [vmem:[%s165 + $0x7c] sm:$0xf]
      %v204 = vld [vmem:[%s165 + $0x80] sm:$0xf]
      %v205 = vld [vmem:[%s165 + $0x84] sm:$0xf]
      %v206 = vld [vmem:[%s165 + $0x88] sm:$0xf]
      %v207 = vld [vmem:[%s165 + $0x8c] sm:$0xf]
      %v208 = vld [vmem:[%s165 + $0x90] sm:$0xf]
      %v209 = vld [vmem:[%s165 + $0x94] sm:$0xf]
      %v210 = vld [vmem:[%s165 + $0x98] sm:$0xf]
      %v211 = vld [vmem:[%s165 + $0x9c] sm:$0xf]
      %v212 = vld [vmem:[%s165 + $0xa0] sm:$0xf]
      %v213 = vld [vmem:[%s165 + $0xa4] sm:$0xf]
      %v214 = vld [vmem:[%s165 + $0xa8] sm:$0xf]
      %v215 = vld [vmem:[%s165 + $0xac] sm:$0xf]
      %v216 = vld [vmem:[%s165 + $0xb0] sm:$0xf]
      %v217 = vld [vmem:[%s165 + $0xb4] sm:$0xf]
      %v218 = vld [vmem:[%s165 + $0xb8] sm:$0xf]
      %v219 = vld [vmem:[%s165 + $0xbc] sm:$0xf]
      %v220 = vld [vmem:[%s165 + $0xc0] sm:$0xf]
      %v221 = vld [vmem:[%s165 + $0xc4] sm:$0xf]
      %v222 = vld [vmem:[%s165 + $0xc8] sm:$0xf]
      %v223 = vld [vmem:[%s165 + $0xcc] sm:$0xf]
      %v224 = vld [vmem:[%s165 + $0xd0] sm:$0xf]
      %v225 = vld [vmem:[%s165 + $0xd4] sm:$0xf]
      %v226 = vld [vmem:[%s165 + $0xd8] sm:$0xf]
      %v227 = vld [vmem:[%s165 + $0xdc] sm:$0xf]
      %v228 = vld [vmem:[%s165 + $0xe0] sm:$0xf]
      %v229 = vld [vmem:[%s165 + $0xe4] sm:$0xf]
      %v230 = vld [vmem:[%s165 + $0xe8] sm:$0xf]
      %v231 = vld [vmem:[%s165 + $0xec] sm:$0xf]
      %v232 = vld [vmem:[%s165 + $0xf0] sm:$0xf]
      %v233 = vld [vmem:[%s165 + $0xf4] sm:$0xf]
      %v234 = vld [vmem:[%s165 + $0xf8] sm:$0xf]
      %v235 = vld [vmem:[%s165 + $0xfc] sm:$0xf]
      %v236 = vld [vmem:[%s165 + $0x100] sm:$0xf]
      %v237 = vld [vmem:[%s165 + $0x104] sm:$0xf]
      %v238 = vld [vmem:[%s165 + $0x108] sm:$0xf]
      %v239 = vld [vmem:[%s165 + $0x10c] sm:$0xf]
      %v240 = vld [vmem:[%s165 + $0x110] sm:$0xf]
      %v241 = vld [vmem:[%s165 + $0x114] sm:$0xf]
      %v242 = vld [vmem:[%s165 + $0x118] sm:$0xf]
      %v243 = vld [vmem:[%s165 + $0x11c] sm:$0xf]
      %v244 = vld [vmem:[%s165 + $0x120] sm:$0xf]
      %v245 = vld [vmem:[%s165 + $0x124] sm:$0xf]
      %v246 = vld [vmem:[%s165 + $0x128] sm:$0xf]
      %v247 = vld [vmem:[%s165 + $0x12c] sm:$0xf]
      %v248 = vld [vmem:[%s165 + $0x130] sm:$0xf]
      %v249 = vld [vmem:[%s165 + $0x134] sm:$0xf]
      %v250 = vld [vmem:[%s165 + $0x138] sm:$0xf]
      %v251 = vld [vmem:[%s165 + $0x13c] sm:$0xf]
      %v252 = vld [vmem:[%s165 + $0x140] sm:$0xf]
      %v253 = vld [vmem:[%s165 + $0x144] sm:$0xf]
      %v254 = vld [vmem:[%s165 + $0x148] sm:$0xf]
      %v255 = vld [vmem:[%s165 + $0x14c] sm:$0xf]
      %v256 = vld [vmem:[%s165 + $0x150] sm:$0xf]
      %v257 = vld [vmem:[%s165 + $0x154] sm:$0xf]
      %v258 = vld [vmem:[%s165 + $0x158] sm:$0xf]
      %v259 = vld [vmem:[%s165 + $0x15c] sm:$0xf]
      %v260 = vld [vmem:[%s165 + $0x160] sm:$0xf]
      %v261 = vld [vmem:[%s165 + $0x164] sm:$0xf]
      %v262 = vld [vmem:[%s165 + $0x168] sm:$0xf]
      %v263 = vld [vmem:[%s165 + $0x16c] sm:$0xf]
      %v264 = vld [vmem:[%s165 + $0x170] sm:$0xf]
      %v265 = vld [vmem:[%s165 + $0x174] sm:$0xf]
      %v266 = vld [vmem:[%s165 + $0x178] sm:$0xf]
      %v267 = vld [vmem:[%s165 + $0x17c] sm:$0xf]
      %v268 = vld [vmem:[%s165 + $0x180] sm:$0xf]
      %v269 = vld [vmem:[%s165 + $0x184] sm:$0xf]
      %v270 = vld [vmem:[%s165 + $0x188] sm:$0xf]
      %v271 = vld [vmem:[%s165 + $0x18c] sm:$0xf]
      %v272 = vld [vmem:[%s1] sm:$0xf]
      %v273 = vld [vmem:[%s1 + $0x4] sm:$0xf]
      %v274 = vld [vmem:[%s1 + $0x8] sm:$0xf]
      %v275 = vld [vmem:[%s1 + $0xc] sm:$0xf]
      %v276 = vld [vmem:[%s1 + $0x10] sm:$0xf]
      %v277 = vld [vmem:[%s1 + $0x14] sm:$0xf]
      %v278 = vld [vmem:[%s1 + $0x18] sm:$0xf]
      %v279 = vld [vmem:[%s1 + $0x1c] sm:$0xf]
      %v280 = vld [vmem:[%s1 + $0x20] sm:$0xf]
      %v281 = vld [vmem:[%s1 + $0x24] sm:$0xf]
      %v282 = vld [vmem:[%s1 + $0x28] sm:$0xf]
      %v283 = vld [vmem:[%s1 + $0x2c] sm:$0xf]
      %v284 = vld [vmem:[%s1 + $0x30] sm:$0xf]
      %v285 = vld [vmem:[%s1 + $0x34] sm:$0xf]
      %v286 = vld [vmem:[%s1 + $0x38] sm:$0xf]
      %v287 = vld [vmem:[%s1 + $0x3c] sm:$0xf]
      %v388 = vunpack.c.l.b16 %v172
      %v389 = vunpack.c.l.b16 %v173
      %v390 = vunpack.c.l.b16 %v174
      %v391 = vunpack.c.l.b16 %v175
      %v392 = vunpack.c.l.b16 %v176
      %v393 = vunpack.c.l.b16 %v177
      %v394 = vunpack.c.l.b16 %v178
      %v395 = vunpack.c.l.b16 %v179
      %v396 = vunpack.c.l.b16 %v180
      %v397 = vunpack.c.l.b16 %v181
      %v398 = vunpack.c.l.b16 %v182
      %v399 = vunpack.c.l.b16 %v183
      %v400 = vunpack.c.l.b16 %v184
      %v401 = vunpack.c.l.b16 %v185
      %v402 = vunpack.c.l.b16 %v186
      %v403 = vunpack.c.l.b16 %v187
      %v404 = vunpack.c.l.b16 %v188
      %v405 = vunpack.c.l.b16 %v189
      %v406 = vunpack.c.l.b16 %v190
      %v407 = vunpack.c.l.b16 %v191
      %v408 = vunpack.c.l.b16 %v192
      %v409 = vunpack.c.l.b16 %v193
      %v410 = vunpack.c.l.b16 %v194
      %v411 = vunpack.c.l.b16 %v195
      %v412 = vunpack.c.l.b16 %v196
      %v413 = vunpack.c.l.b16 %v197
      %v414 = vunpack.c.l.b16 %v198
      %v415 = vunpack.c.l.b16 %v199
      %v416 = vunpack.c.l.b16 %v200
      %v417 = vunpack.c.l.b16 %v201
      %v418 = vunpack.c.l.b16 %v202
      %v419 = vunpack.c.l.b16 %v203
      %v420 = vunpack.c.l.b16 %v204
      %v421 = vunpack.c.l.b16 %v205
      %v422 = vunpack.c.l.b16 %v206
      %v423 = vunpack.c.l.b16 %v207
      %v424 = vunpack.c.l.b16 %v208
      %v425 = vunpack.c.l.b16 %v209
      %v426 = vunpack.c.l.b16 %v210
      %v427 = vunpack.c.l.b16 %v211
      %v428 = vunpack.c.l.b16 %v212
      %v429 = vunpack.c.l.b16 %v213
      %v430 = vunpack.c.l.b16 %v214
      %v431 = vunpack.c.l.b16 %v215
      %v432 = vunpack.c.l.b16 %v216
      %v433 = vunpack.c.l.b16 %v217
      %v434 = vunpack.c.l.b16 %v218
      %v435 = vunpack.c.l.b16 %v219
      %v436 = vunpack.c.l.b16 %v220
      %v437 = vunpack.c.l.b16 %v221
      %v438 = vunpack.c.l.b16 %v222
      %v439 = vunpack.c.l.b16 %v223
      %v440 = vunpack.c.l.b16 %v224
      %v441 = vunpack.c.l.b16 %v225
      %v442 = vunpack.c.l.b16 %v226
      %v443 = vunpack.c.l.b16 %v227
      %v444 = vunpack.c.l.b16 %v228
      %v445 = vunpack.c.l.b16 %v229
      %v446 = vunpack.c.l.b16 %v230
      %v447 = vunpack.c.l.b16 %v231
      %v448 = vunpack.c.l.b16 %v232
      %v449 = vunpack.c.l.b16 %v233
      %v450 = vunpack.c.l.b16 %v234
      %v451 = vunpack.c.l.b16 %v235
      %v452 = vunpack.c.l.b16 %v236
      %v453 = vunpack.c.l.b16 %v237
      %v454 = vunpack.c.l.b16 %v238
      %v455 = vunpack.c.l.b16 %v239
      %v456 = vunpack.c.l.b16 %v240
      %v457 = vunpack.c.l.b16 %v241
      %v458 = vunpack.c.l.b16 %v242
      %v459 = vunpack.c.l.b16 %v243
      %v460 = vunpack.c.l.b16 %v244
      %v461 = vunpack.c.l.b16 %v245
      %v462 = vunpack.c.l.b16 %v246
      %v463 = vunpack.c.l.b16 %v247
      %v464 = vunpack.c.l.b16 %v248
      %v465 = vunpack.c.l.b16 %v249
      %v466 = vunpack.c.l.b16 %v250
      %v467 = vunpack.c.l.b16 %v251
      %v468 = vunpack.c.l.b16 %v252
      %v469 = vunpack.c.l.b16 %v253
      %v470 = vunpack.c.l.b16 %v254
      %v471 = vunpack.c.l.b16 %v255
      %v472 = vunpack.c.l.b16 %v256
      %v473 = vunpack.c.l.b16 %v257
      %v474 = vunpack.c.l.b16 %v258
      %v475 = vunpack.c.l.b16 %v259
      %v476 = vunpack.c.l.b16 %v260
      %v477 = vunpack.c.l.b16 %v261
      %v478 = vunpack.c.l.b16 %v262
      %v479 = vunpack.c.l.b16 %v263
      %v480 = vunpack.c.l.b16 %v264
      %v481 = vunpack.c.l.b16 %v265
      %v482 = vunpack.c.l.b16 %v266
      %v483 = vunpack.c.l.b16 %v267
      %v484 = vunpack.c.l.b16 %v268
      %v485 = vunpack.c.l.b16 %v269
      %v486 = vunpack.c.l.b16 %v270
      %v487 = vunpack.c.l.b16 %v271
      %v488 = vpack.c.b16 %v389, %v388
      %v489 = vpack.c.b16 %v391, %v390
      %v490 = vpack.c.b16 %v393, %v392
      %v491 = vpack.c.b16 %v395, %v394
      %v492 = vpack.c.b16 %v397, %v396
      %v493 = vpack.c.b16 %v399, %v398
      %v494 = vpack.c.b16 %v401, %v400
      %v495 = vpack.c.b16 %v403, %v402
      %v496 = vpack.c.b16 %v405, %v404
      %v497 = vpack.c.b16 %v407, %v406
      %v498 = vpack.c.b16 %v409, %v408
      %v499 = vpack.c.b16 %v411, %v410
      %v500 = vpack.c.b16 %v413, %v412
      %v501 = vpack.c.b16 %v415, %v414
      %v502 = vpack.c.b16 %v417, %v416
      %v503 = vpack.c.b16 %v419, %v418
      %v504 = vpack.c.b16 %v421, %v420
      %v505 = vpack.c.b16 %v423, %v422
      %v506 = vpack.c.b16 %v425, %v424
      %v507 = vpack.c.b16 %v427, %v426
      %v508 = vpack.c.b16 %v429, %v428
      %v509 = vpack.c.b16 %v431, %v430
      %v510 = vpack.c.b16 %v433, %v432
      %v511 = vpack.c.b16 %v435, %v434
      %v512 = vpack.c.b16 %v437, %v436
      %v513 = vpack.c.b16 %v439, %v438
      %v514 = vpack.c.b16 %v441, %v440
      %v515 = vpack.c.b16 %v443, %v442
      %v516 = vpack.c.b16 %v445, %v444
      %v517 = vpack.c.b16 %v447, %v446
      %v518 = vpack.c.b16 %v449, %v448
      %v519 = vpack.c.b16 %v451, %v450
      %v520 = vpack.c.b16 %v453, %v452
      %v521 = vpack.c.b16 %v455, %v454
      %v522 = vpack.c.b16 %v457, %v456
      %v523 = vpack.c.b16 %v459, %v458
      %v524 = vpack.c.b16 %v461, %v460
      %v525 = vpack.c.b16 %v463, %v462
      %v526 = vpack.c.b16 %v465, %v464
      %v527 = vpack.c.b16 %v467, %v466
      %v528 = vpack.c.b16 %v469, %v468
      %v529 = vpack.c.b16 %v471, %v470
      %v530 = vpack.c.b16 %v473, %v472
      %v531 = vpack.c.b16 %v475, %v474
      %v532 = vpack.c.b16 %v477, %v476
      %v533 = vpack.c.b16 %v479, %v478
      %v534 = vpack.c.b16 %v481, %v480
      %v535 = vpack.c.b16 %v483, %v482
      %v536 = vpack.c.b16 %v485, %v484
      %v537 = vpack.c.b16 %v487, %v486
      %v604 = vunpack.c.l.b16 %v272
      %v605 = vunpack.c.l.b16 %v273
      %v606 = vunpack.c.l.b16 %v274
      %v607 = vunpack.c.l.b16 %v275
      %v608 = vunpack.c.l.b16 %v276
      %v609 = vunpack.c.l.b16 %v277
      %v610 = vunpack.c.l.b16 %v278
      %v611 = vunpack.c.l.b16 %v279
      %v612 = vunpack.c.l.b16 %v280
      %v613 = vunpack.c.l.b16 %v281
      %v614 = vunpack.c.l.b16 %v282
      %v615 = vunpack.c.l.b16 %v283
      %v616 = vunpack.c.l.b16 %v284
      %v617 = vunpack.c.l.b16 %v285
      %v618 = vunpack.c.l.b16 %v286
      %v619 = vunpack.c.l.b16 %v287
      %v620 = vpack.c.b16 %v605, %v604
      %v621 = vpack.c.b16 %v607, %v606
      %v622 = vpack.c.b16 %v609, %v608
      %v623 = vpack.c.b16 %v611, %v610
      %v624 = vpack.c.b16 %v613, %v612
      %v625 = vpack.c.b16 %v615, %v614
      %v626 = vpack.c.b16 %v617, %v616
      %v627 = vpack.c.b16 %v619, %v618
      %636 = vmatprep.subr.bf16.mxu0 0
      %637 = vmatpush1.bf16.msra.mxu0 %v620
      %638 = vmatprep.subr.bf16.mxu0 0
      %639 = vmatpush1.bf16.msra.mxu0 %v621
      %640 = vmatprep.subr.bf16.mxu0 0
      %641 = vmatpush1.bf16.msra.mxu0 %v622
      %642 = vmatprep.subr.bf16.mxu0 0
      %643 = vmatpush1.bf16.msra.mxu0 %v623
      %644 = vmatprep.subr.bf16.mxu0 0
      %645 = vmatpush1.bf16.msra.mxu0 %v624
      %646 = vmatprep.subr.bf16.mxu0 0
      %647 = vmatpush1.bf16.msra.mxu0 %v625
      %648 = vmatprep.subr.bf16.mxu0 0
      %649 = vmatpush1.bf16.msra.mxu0 %v626
      %650 = vmatprep.subr.bf16.mxu0 0
      %651 = vmatpush1.bf16.msra.mxu0 %v627
      %652 = vmatprep.subr.bf16.mxu0 0
      %653 = vmatpush1.bf16.msra.mxu0 0
      %654 = vmatprep.subr.bf16.mxu0 0
      %655 = vmatpush1.bf16.msra.mxu0 0
      %656 = vmatprep.subr.bf16.mxu0 0
      %657 = vmatpush1.bf16.msra.mxu0 0
      %658 = vmatprep.subr.bf16.mxu0 0
      %659 = vmatpush1.bf16.msra.mxu0 0
      %660 = vmatprep.subr.bf16.mxu0 0
      %661 = vmatpush1.bf16.msra.mxu0 0
      %662 = vmatprep.subr.bf16.mxu0 0
      %663 = vmatpush1.bf16.msra.mxu0 0
      %664 = vmatprep.subr.bf16.mxu0 0
      %665 = vmatpush1.bf16.msra.mxu0 0
      %666 = vmatprep.subr.bf16.mxu0 0
      %667 = vmatpush1.bf16.msra.mxu0 0
      %668 = vmatprep.mubr.bf16.mxu0 0
      %669 = vmatmul.mubr.bf16.gmra.mrb[0].mxu0 %v488
      %v670 = vpop.f32.mrb[0].mxu0
      %v671 = vadd.f32 0.0, %v670
      %v672 = vpop.f32.mrb[0].mxu0
      %v673 = vpop.f32.mrb[0].mxu0
      %v674 = vadd.f32 0.0, %v673
      %v675 = vpop.f32.mrb[0].mxu0
      %676 = vmatprep.mubr.bf16.mxu0 0
      %677 = vmatmul.mubr.bf16.gmra.mrb[0].mxu0 %v489
      %v678 = vpop.f32.mrb[0].mxu0
      %v679 = vadd.f32 0.0, %v678
      %v680 = vpop.f32.mrb[0].mxu0
      %v681 = vpop.f32.mrb[0].mxu0
      %v682 = vadd.f32 0.0, %v681
      %v683 = vpop.f32.mrb[0].mxu0
      %684 = vmatprep.mubr.bf16.mxu0 0
      %685 = vmatmul.mubr.bf16.gmra.mrb[0].mxu0 %v490
      %v686 = vpop.f32.mrb[0].mxu0
      %v687 = vadd.f32 0.0, %v686
      %v688 = vpop.f32.mrb[0].mxu0
      %v689 = vpop.f32.mrb[0].mxu0
      %v690 = vadd.f32 0.0, %v689
      %v691 = vpop.f32.mrb[0].mxu0
      %692 = vmatprep.mubr.bf16.mxu0 0
      %693 = vmatmul.mubr.bf16.gmra.mrb[0].mxu0 %v491
      %v694 = vpop.f32.mrb[0].mxu0
      %v695 = vadd.f32 0.0, %v694
      %v696 = vpop.f32.mrb[0].mxu0
      %v697 = vpop.f32.mrb[0].mxu0
      %v698 = vadd.f32 0.0, %v697
      %v699 = vpop.f32.mrb[0].mxu0
      %700 = vmatprep.mubr.bf16.mxu0 0
      %701 = vmatmul.mubr.bf16.gmra.mrb[0].mxu0 %v492
      %v702 = vpop.f32.mrb[0].mxu0
      %v703 = vadd.f32 0.0, %v702
      %v704 = vpop.f32.mrb[0].mxu0
      %v705 = vpop.f32.mrb[0].mxu0
      %v706 = vadd.f32 0.0, %v705
      %v707 = vpop.f32.mrb[0].mxu0
      %708 = vmatprep.mubr.bf16.mxu0 0
      %709 = vmatmul.mubr.bf16.gmra.mrb[0].mxu0 %v493
      %v710 = vpop.f32.mrb[0].mxu0
      %v711 = vadd.f32 0.0, %v710
      %v712 = vpop.f32.mrb[0].mxu0
      %v713 = vpop.f32.mrb[0].mxu0
      %v714 = vadd.f32 0.0, %v713
      %v715 = vpop.f32.mrb[0].mxu0
      %716 = vmatprep.mubr.bf16.mxu0 0
      %717 = vmatmul.mubr.bf16.gmra.mrb[0].mxu0 %v494
      %v718 = vpop.f32.mrb[0].mxu0
      %v719 = vadd.f32 0.0, %v718
      %v720 = vpop.f32.mrb[0].mxu0
      %v721 = vpop.f32.mrb[0].mxu0
      %v722 = vadd.f32 0.0, %v721
      %v723 = vpop.f32.mrb[0].mxu0
      %724 = vmatprep.mubr.bf16.mxu0 0
      %725 = vmatmul.mubr.bf16.gmra.mrb[0].mxu0 %v495
      %v726 = vpop.f32.mrb[0].mxu0
      %v727 = vadd.f32 0.0, %v726
      %v728 = vpop.f32.mrb[0].mxu0
      %v729 = vpop.f32.mrb[0].mxu0
      %v730 = vadd.f32 0.0, %v729
      %v731 = vpop.f32.mrb[0].mxu0
      %732 = vmatprep.mubr.bf16.mxu0 0
      %733 = vmatmul.mubr.bf16.gmra.mrb[0].mxu0 %v496
      %v734 = vpop.f32.mrb[0].mxu0
      %v735 = vadd.f32 0.0, %v734
      %v736 = vpop.f32.mrb[0].mxu0
      %v737 = vpop.f32.mrb[0].mxu0
      %v738 = vadd.f32 0.0, %v737
      %v739 = vpop.f32.mrb[0].mxu0
      %740 = vmatprep.mubr.bf16.mxu0 0
      %741 = vmatmul.mubr.bf16.gmra.mrb[0].mxu0 %v497
      %v742 = vpop.f32.mrb[0].mxu0
      %v743 = vadd.f32 0.0, %v742
      %v744 = vpop.f32.mrb[0].mxu0
      %v745 = vpop.f32.mrb[0].mxu0
      %v746 = vadd.f32 0.0, %v745
      %v747 = vpop.f32.mrb[0].mxu0
      %748 = vmatprep.mubr.bf16.mxu0 0
      %749 = vmatmul.mubr.bf16.gmra.mrb[0].mxu0 %v498
      %v750 = vpop.f32.mrb[0].mxu0
      %v751 = vadd.f32 0.0, %v750
      %v752 = vpop.f32.mrb[0].mxu0
      %v753 = vpop.f32.mrb[0].mxu0
      %v754 = vadd.f32 0.0, %v753
      %v755 = vpop.f32.mrb[0].mxu0
      %756 = vmatprep.mubr.bf16.mxu0 0
      %757 = vmatmul.mubr.bf16.gmra.mrb[0].mxu0 %v499
      %v758 = vpop.f32.mrb[0].mxu0
      %v759 = vadd.f32 0.0, %v758
      %v760 = vpop.f32.mrb[0].mxu0
      %v761 = vpop.f32.mrb[0].mxu0
      %v762 = vadd.f32 0.0, %v761
      %v763 = vpop.f32.mrb[0].mxu0
      %764 = vmatprep.mubr.bf16.mxu0 0
      %765 = vmatmul.mubr.bf16.gmra.mrb[0].mxu0 %v500
      %v766 = vpop.f32.mrb[0].mxu0
      %v767 = vadd.f32 0.0, %v766
      %v768 = vpop.f32.mrb[0].mxu0
      %v769 = vpop.f32.mrb[0].mxu0
      %v770 = vadd.f32 0.0, %v769
      %v771 = vpop.f32.mrb[0].mxu0
      %772 = vmatprep.mubr.bf16.mxu0 0
      %773 = vmatmul.mubr.bf16.gmra.mrb[0].mxu0 %v501
      %v774 = vpop.f32.mrb[0].mxu0
      %v775 = vadd.f32 0.0, %v774
      %v776 = vpop.f32.mrb[0].mxu0
      %v777 = vpop.f32.mrb[0].mxu0
      %v778 = vadd.f32 0.0, %v777
      %v779 = vpop.f32.mrb[0].mxu0
      %780 = vmatprep.mubr.bf16.mxu0 0
      %781 = vmatmul.mubr.bf16.gmra.mrb[0].mxu0 %v502
      %v782 = vpop.f32.mrb[0].mxu0
      %v783 = vadd.f32 0.0, %v782
      %v784 = vpop.f32.mrb[0].mxu0
      %v785 = vpop.f32.mrb[0].mxu0
      %v786 = vadd.f32 0.0, %v785
      %v787 = vpop.f32.mrb[0].mxu0
      %788 = vmatprep.mubr.bf16.mxu0 0
      %789 = vmatmul.mubr.bf16.gmra.mrb[0].mxu0 %v503
      %v790 = vpop.f32.mrb[0].mxu0
      %v791 = vadd.f32 0.0, %v790
      %v792 = vpop.f32.mrb[0].mxu0
      %v793 = vpop.f32.mrb[0].mxu0
      %v794 = vadd.f32 0.0, %v793
      %v795 = vpop.f32.mrb[0].mxu0
      %796 = vmatprep.mubr.bf16.mxu0 0
      %797 = vmatmul.mubr.bf16.gmra.mrb[0].mxu0 %v504
      %v798 = vpop.f32.mrb[0].mxu0
      %v799 = vadd.f32 0.0, %v798
      %v800 = vpop.f32.mrb[0].mxu0
      %v801 = vpop.f32.mrb[0].mxu0
      %v802 = vadd.f32 0.0, %v801
      %v803 = vpop.f32.mrb[0].mxu0
      %804 = vmatprep.mubr.bf16.mxu0 0
      %805 = vmatmul.mubr.bf16.gmra.mrb[0].mxu0 %v505
      %v806 = vpop.f32.mrb[0].mxu0
      %v807 = vadd.f32 0.0, %v806
      %v808 = vpop.f32.mrb[0].mxu0
      %v809 = vpop.f32.mrb[0].mxu0
      %v810 = vadd.f32 0.0, %v809
      %v811 = vpop.f32.mrb[0].mxu0
      %812 = vmatprep.mubr.bf16.mxu0 0
      %813 = vmatmul.mubr.bf16.gmra.mrb[0].mxu0 %v506
      %v814 = vpop.f32.mrb[0].mxu0
      %v815 = vadd.f32 0.0, %v814
      %v816 = vpop.f32.mrb[0].mxu0
      %v817 = vpop.f32.mrb[0].mxu0
      %v818 = vadd.f32 0.0, %v817
      %v819 = vpop.f32.mrb[0].mxu0
      %820 = vmatprep.mubr.bf16.mxu0 0
      %821 = vmatmul.mubr.bf16.gmra.mrb[0].mxu0 %v507
      %v822 = vpop.f32.mrb[0].mxu0
      %v823 = vadd.f32 0.0, %v822
      %v824 = vpop.f32.mrb[0].mxu0
      %v825 = vpop.f32.mrb[0].mxu0
      %v826 = vadd.f32 0.0, %v825
      %v827 = vpop.f32.mrb[0].mxu0
      %828 = vmatprep.mubr.bf16.mxu0 0
      %829 = vmatmul.mubr.bf16.gmra.mrb[0].mxu0 %v508
      %v830 = vpop.f32.mrb[0].mxu0
      %v831 = vadd.f32 0.0, %v830
      %v832 = vpop.f32.mrb[0].mxu0
      %v833 = vpop.f32.mrb[0].mxu0
      %v834 = vadd.f32 0.0, %v833
      %v835 = vpop.f32.mrb[0].mxu0
      %836 = vmatprep.mubr.bf16.mxu0 0
      %837 = vmatmul.mubr.bf16.gmra.mrb[0].mxu0 %v509
      %v838 = vpop.f32.mrb[0].mxu0
      %v839 = vadd.f32 0.0, %v838
      %v840 = vpop.f32.mrb[0].mxu0
      %v841 = vpop.f32.mrb[0].mxu0
      %v842 = vadd.f32 0.0, %v841
      %v843 = vpop.f32.mrb[0].mxu0
      %844 = vmatprep.mubr.bf16.mxu0 0
      %845 = vmatmul.mubr.bf16.gmra.mrb[0].mxu0 %v510
      %v846 = vpop.f32.mrb[0].mxu0
      %v847 = vadd.f32 0.0, %v846
      %v848 = vpop.f32.mrb[0].mxu0
      %v849 = vpop.f32.mrb[0].mxu0
      %v850 = vadd.f32 0.0, %v849
      %v851 = vpop.f32.mrb[0].mxu0
      %852 = vmatprep.mubr.bf16.mxu0 0
      %853 = vmatmul.mubr.bf16.gmra.mrb[0].mxu0 %v511
      %v854 = vpop.f32.mrb[0].mxu0
      %v855 = vadd.f32 0.0, %v854
      %v856 = vpop.f32.mrb[0].mxu0
      %v857 = vpop.f32.mrb[0].mxu0
      %v858 = vadd.f32 0.0, %v857
      %v859 = vpop.f32.mrb[0].mxu0
      %860 = vmatprep.mubr.bf16.mxu0 0
      %861 = vmatmul.mubr.bf16.gmra.mrb[0].mxu0 %v512
      %v862 = vpop.f32.mrb[0].mxu0
      %v863 = vadd.f32 0.0, %v862
      %v864 = vpop.f32.mrb[0].mxu0
      %v865 = vpop.f32.mrb[0].mxu0
      %v866 = vadd.f32 0.0, %v865
      %v867 = vpop.f32.mrb[0].mxu0
      %868 = vmatprep.mubr.bf16.mxu0 0
      %869 = vmatmul.mubr.bf16.gmra.mrb[0].mxu0 %v513
      %v870 = vpop.f32.mrb[0].mxu0
      %v871 = vadd.f32 0.0, %v870
      %v872 = vpop.f32.mrb[0].mxu0
      %v873 = vpop.f32.mrb[0].mxu0
      %v874 = vadd.f32 0.0, %v873
      %v875 = vpop.f32.mrb[0].mxu0
      %876 = vmatprep.mubr.bf16.mxu0 0
      %877 = vmatmul.mubr.bf16.gmra.mrb[0].mxu0 %v514
      %v878 = vpop.f32.mrb[0].mxu0
      %v879 = vadd.f32 0.0, %v878
      %v880 = vpop.f32.mrb[0].mxu0
      %v881 = vpop.f32.mrb[0].mxu0
      %v882 = vadd.f32 0.0, %v881
      %v883 = vpop.f32.mrb[0].mxu0
      %884 = vmatprep.mubr.bf16.mxu0 0
      %885 = vmatmul.mubr.bf16.gmra.mrb[0].mxu0 %v515
      %v886 = vpop.f32.mrb[0].mxu0
      %v887 = vadd.f32 0.0, %v886
      %v888 = vpop.f32.mrb[0].mxu0
      %v889 = vpop.f32.mrb[0].mxu0
      %v890 = vadd.f32 0.0, %v889
      %v891 = vpop.f32.mrb[0].mxu0
      %892 = vmatprep.mubr.bf16.mxu0 0
      %893 = vmatmul.mubr.bf16.gmra.mrb[0].mxu0 %v516
      %v894 = vpop.f32.mrb[0].mxu0
      %v895 = vadd.f32 0.0, %v894
      %v896 = vpop.f32.mrb[0].mxu0
      %v897 = vpop.f32.mrb[0].mxu0
      %v898 = vadd.f32 0.0, %v897
      %v899 = vpop.f32.mrb[0].mxu0
      %900 = vmatprep.mubr.bf16.mxu0 0
      %901 = vmatmul.mubr.bf16.gmra.mrb[0].mxu0 %v517
      %v902 = vpop.f32.mrb[0].mxu0
      %v903 = vadd.f32 0.0, %v902
      %v904 = vpop.f32.mrb[0].mxu0
      %v905 = vpop.f32.mrb[0].mxu0
      %v906 = vadd.f32 0.0, %v905
      %v907 = vpop.f32.mrb[0].mxu0
      %908 = vmatprep.mubr.bf16.mxu0 0
      %909 = vmatmul.mubr.bf16.gmra.mrb[0].mxu0 %v518
      %v910 = vpop.f32.mrb[0].mxu0
      %v911 = vadd.f32 0.0, %v910
      %v912 = vpop.f32.mrb[0].mxu0
      %v913 = vpop.f32.mrb[0].mxu0
      %v914 = vadd.f32 0.0, %v913
      %v915 = vpop.f32.mrb[0].mxu0
      %916 = vmatprep.mubr.bf16.mxu0 0
      %917 = vmatmul.mubr.bf16.gmra.mrb[0].mxu0 %v519
      %v918 = vpop.f32.mrb[0].mxu0
      %v919 = vadd.f32 0.0, %v918
      %v920 = vpop.f32.mrb[0].mxu0
      %v921 = vpop.f32.mrb[0].mxu0
      %v922 = vadd.f32 0.0, %v921
      %v923 = vpop.f32.mrb[0].mxu0
      %924 = vmatprep.mubr.bf16.mxu0 0
      %925 = vmatmul.mubr.bf16.gmra.mrb[0].mxu0 %v520
      %v926 = vpop.f32.mrb[0].mxu0
      %v927 = vadd.f32 0.0, %v926
      %v928 = vpop.f32.mrb[0].mxu0
      %v929 = vpop.f32.mrb[0].mxu0
      %v930 = vadd.f32 0.0, %v929
      %v931 = vpop.f32.mrb[0].mxu0
      %932 = vmatprep.mubr.bf16.mxu0 0
      %933 = vmatmul.mubr.bf16.gmra.mrb[0].mxu0 %v521
      %v934 = vpop.f32.mrb[0].mxu0
      %v935 = vadd.f32 0.0, %v934
      %v936 = vpop.f32.mrb[0].mxu0
      %v937 = vpop.f32.mrb[0].mxu0
      %v938 = vadd.f32 0.0, %v937
      %v939 = vpop.f32.mrb[0].mxu0
      %940 = vmatprep.mubr.bf16.mxu0 0
      %941 = vmatmul.mubr.bf16.gmra.mrb[0].mxu0 %v522
      %v942 = vpop.f32.mrb[0].mxu0
      %v943 = vadd.f32 0.0, %v942
      %v944 = vpop.f32.mrb[0].mxu0
      %v945 = vpop.f32.mrb[0].mxu0
      %v946 = vadd.f32 0.0, %v945
      %v947 = vpop.f32.mrb[0].mxu0
      %948 = vmatprep.mubr.bf16.mxu0 0
      %949 = vmatmul.mubr.bf16.gmra.mrb[0].mxu0 %v523
      %v950 = vpop.f32.mrb[0].mxu0
      %v951 = vadd.f32 0.0, %v950
      %v952 = vpop.f32.mrb[0].mxu0
      %v953 = vpop.f32.mrb[0].mxu0
      %v954 = vadd.f32 0.0, %v953
      %v955 = vpop.f32.mrb[0].mxu0
      %956 = vmatprep.mubr.bf16.mxu0 0
      %957 = vmatmul.mubr.bf16.gmra.mrb[0].mxu0 %v524
      %v958 = vpop.f32.mrb[0].mxu0
      %v959 = vadd.f32 0.0, %v958
      %v960 = vpop.f32.mrb[0].mxu0
      %v961 = vpop.f32.mrb[0].mxu0
      %v962 = vadd.f32 0.0, %v961
      %v963 = vpop.f32.mrb[0].mxu0
      %964 = vmatprep.mubr.bf16.mxu0 0
      %965 = vmatmul.mubr.bf16.gmra.mrb[0].mxu0 %v525
      %v966 = vpop.f32.mrb[0].mxu0
      %v967 = vadd.f32 0.0, %v966
      %v968 = vpop.f32.mrb[0].mxu0
      %v969 = vpop.f32.mrb[0].mxu0
      %v970 = vadd.f32 0.0, %v969
      %v971 = vpop.f32.mrb[0].mxu0
      %972 = vmatprep.mubr.bf16.mxu0 0
      %973 = vmatmul.mubr.bf16.gmra.mrb[0].mxu0 %v526
      %v974 = vpop.f32.mrb[0].mxu0
      %v975 = vadd.f32 0.0, %v974
      %v976 = vpop.f32.mrb[0].mxu0
      %v977 = vpop.f32.mrb[0].mxu0
      %v978 = vadd.f32 0.0, %v977
      %v979 = vpop.f32.mrb[0].mxu0
      %980 = vmatprep.mubr.bf16.mxu0 0
      %981 = vmatmul.mubr.bf16.gmra.mrb[0].mxu0 %v527
      %v982 = vpop.f32.mrb[0].mxu0
      %v983 = vadd.f32 0.0, %v982
      %v984 = vpop.f32.mrb[0].mxu0
      %v985 = vpop.f32.mrb[0].mxu0
      %v986 = vadd.f32 0.0, %v985
      %v987 = vpop.f32.mrb[0].mxu0
      %988 = vmatprep.mubr.bf16.mxu0 0
      %989 = vmatmul.mubr.bf16.gmra.mrb[0].mxu0 %v528
      %v990 = vpop.f32.mrb[0].mxu0
      %v991 = vadd.f32 0.0, %v990
      %v992 = vpop.f32.mrb[0].mxu0
      %v993 = vpop.f32.mrb[0].mxu0
      %v994 = vadd.f32 0.0, %v993
      %v995 = vpop.f32.mrb[0].mxu0
      %996 = vmatprep.mubr.bf16.mxu0 0
      %997 = vmatmul.mubr.bf16.gmra.mrb[0].mxu0 %v529
      %v998 = vpop.f32.mrb[0].mxu0
      %v999 = vadd.f32 0.0, %v998
      %v1000 = vpop.f32.mrb[0].mxu0
      %v1001 = vpop.f32.mrb[0].mxu0
      %v1002 = vadd.f32 0.0, %v1001
      %v1003 = vpop.f32.mrb[0].mxu0
      %1004 = vmatprep.mubr.bf16.mxu0 0
      %1005 = vmatmul.mubr.bf16.gmra.mrb[0].mxu0 %v530
      %v1006 = vpop.f32.mrb[0].mxu0
      %v1007 = vadd.f32 0.0, %v1006
      %v1008 = vpop.f32.mrb[0].mxu0
      %v1009 = vpop.f32.mrb[0].mxu0
      %v1010 = vadd.f32 0.0, %v1009
      %v1011 = vpop.f32.mrb[0].mxu0
      %1012 = vmatprep.mubr.bf16.mxu0 0
      %1013 = vmatmul.mubr.bf16.gmra.mrb[0].mxu0 %v531
      %v1014 = vpop.f32.mrb[0].mxu0
      %v1015 = vadd.f32 0.0, %v1014
      %v1016 = vpop.f32.mrb[0].mxu0
      %v1017 = vpop.f32.mrb[0].mxu0
      %v1018 = vadd.f32 0.0, %v1017
      %v1019 = vpop.f32.mrb[0].mxu0
      %1020 = vmatprep.mubr.bf16.mxu0 0
      %1021 = vmatmul.mubr.bf16.gmra.mrb[0].mxu0 %v532
      %v1022 = vpop.f32.mrb[0].mxu0
      %v1023 = vadd.f32 0.0, %v1022
      %v1024 = vpop.f32.mrb[0].mxu0
      %v1025 = vpop.f32.mrb[0].mxu0
      %v1026 = vadd.f32 0.0, %v1025
      %v1027 = vpop.f32.mrb[0].mxu0
      %1028 = vmatprep.mubr.bf16.mxu0 0
      %1029 = vmatmul.mubr.bf16.gmra.mrb[0].mxu0 %v533
      %v1030 = vpop.f32.mrb[0].mxu0
      %v1031 = vadd.f32 0.0, %v1030
      %v1032 = vpop.f32.mrb[0].mxu0
      %v1033 = vpop.f32.mrb[0].mxu0
      %v1034 = vadd.f32 0.0, %v1033
      %v1035 = vpop.f32.mrb[0].mxu0
      %1036 = vmatprep.mubr.bf16.mxu0 0
      %1037 = vmatmul.mubr.bf16.gmra.mrb[0].mxu0 %v534
      %v1038 = vpop.f32.mrb[0].mxu0
      %v1039 = vadd.f32 0.0, %v1038
      %v1040 = vpop.f32.mrb[0].mxu0
      %v1041 = vpop.f32.mrb[0].mxu0
      %v1042 = vadd.f32 0.0, %v1041
      %v1043 = vpop.f32.mrb[0].mxu0
      %1044 = vmatprep.mubr.bf16.mxu0 0
      %1045 = vmatmul.mubr.bf16.gmra.mrb[0].mxu0 %v535
      %v1046 = vpop.f32.mrb[0].mxu0
      %v1047 = vadd.f32 0.0, %v1046
      %v1048 = vpop.f32.mrb[0].mxu0
      %v1049 = vpop.f32.mrb[0].mxu0
      %v1050 = vadd.f32 0.0, %v1049
      %v1051 = vpop.f32.mrb[0].mxu0
      %1052 = vmatprep.mubr.bf16.mxu0 0
      %1053 = vmatmul.mubr.bf16.gmra.mrb[0].mxu0 %v536
      %v1054 = vpop.f32.mrb[0].mxu0
      %v1055 = vadd.f32 0.0, %v1054
      %v1056 = vpop.f32.mrb[0].mxu0
      %v1057 = vpop.f32.mrb[0].mxu0
      %v1058 = vadd.f32 0.0, %v1057
      %v1059 = vpop.f32.mrb[0].mxu0
      %1060 = vmatprep.mubr.bf16.mxu0 0
      %1061 = vmatmul.mubr.bf16.gmra.mrb[0].mxu0 %v537
      %v1062 = vpop.f32.mrb[0].mxu0
      %v1063 = vadd.f32 0.0, %v1062
      %v1064 = vpop.f32.mrb[0].mxu0
      %v1065 = vpop.f32.mrb[0].mxu0
      %v1066 = vadd.f32 0.0, %v1065
      %v1067 = vpop.f32.mrb[0].mxu0
      %1068 = vdwg.mxu0
      %v1069 = vmax.f32 %v671, %v770
      %v1070 = vmax.f32 %v1069, %v871
      %v1071 = vmax.f32 %v1070, %v970
      %v1072 = vmax.f32 %v674, %v775
      %v1073 = vmax.f32 %v1072, %v874
      %v1074 = vmax.f32 %v1073, %v975
      %v1075 = vmax.f32 %v679, %v778
      %v1076 = vmax.f32 %v1075, %v879
      %v1077 = vmax.f32 %v1076, %v978
      %v1078 = vmax.f32 %v682, %v783
      %v1079 = vmax.f32 %v1078, %v882
      %v1080 = vmax.f32 %v1079, %v983
      %v1081 = vmax.f32 %v687, %v786
      %v1082 = vmax.f32 %v1081, %v887
      %v1083 = vmax.f32 %v1082, %v986
      %v1084 = vmax.f32 %v690, %v791
      %v1085 = vmax.f32 %v1084, %v890
      %v1086 = vmax.f32 %v1085, %v991
      %v1087 = vmax.f32 %v695, %v794
      %v1088 = vmax.f32 %v1087, %v895
      %v1089 = vmax.f32 %v1088, %v994
      %v1090 = vmax.f32 %v698, %v799
      %v1091 = vmax.f32 %v1090, %v898
      %v1092 = vmax.f32 %v1091, %v999
      %v1093 = vmax.f32 %v703, %v802
      %v1094 = vmax.f32 %v1093, %v903
      %v1095 = vmax.f32 %v1094, %v1002
      %v1096 = vmax.f32 %v706, %v807
      %v1097 = vmax.f32 %v1096, %v906
      %v1098 = vmax.f32 %v1097, %v1007
      %v1099 = vmax.f32 %v711, %v810
      %v1100 = vmax.f32 %v1099, %v911
      %v1101 = vmax.f32 %v1100, %v1010
      %v1102 = vmax.f32 %v714, %v815
      %v1103 = vmax.f32 %v1102, %v914
      %v1104 = vmax.f32 %v1103, %v1015
      %v1105 = vmax.f32 %v719, %v818
      %v1106 = vmax.f32 %v1105, %v919
      %v1107 = vmax.f32 %v1106, %v1018
      %v1108 = vmax.f32 %v722, %v823
      %v1109 = vmax.f32 %v1108, %v922
      %v1110 = vmax.f32 %v1109, %v1023
      %v1111 = vmax.f32 %v727, %v826
      %v1112 = vmax.f32 %v1111, %v927
      %v1113 = vmax.f32 %v1112, %v1026
      %v1114 = vmax.f32 %v730, %v831
      %v1115 = vmax.f32 %v1114, %v930
      %v1116 = vmax.f32 %v1115, %v1031
      %v1117 = vmax.f32 %v735, %v834
      %v1118 = vmax.f32 %v1117, %v935
      %v1119 = vmax.f32 %v1118, %v1034
      %v1120 = vmax.f32 %v738, %v839
      %v1121 = vmax.f32 %v1120, %v938
      %v1122 = vmax.f32 %v1121, %v1039
      %v1123 = vmax.f32 %v743, %v842
      %v1124 = vmax.f32 %v1123, %v943
      %v1125 = vmax.f32 %v1124, %v1042
      %v1126 = vmax.f32 %v746, %v847
      %v1127 = vmax.f32 %v1126, %v946
      %v1128 = vmax.f32 %v1127, %v1047
      %v1129 = vmax.f32 %v751, %v850
      %v1130 = vmax.f32 %v1129, %v951
      %v1131 = vmax.f32 %v1130, %v1050
      %v1132 = vmax.f32 %v754, %v855
      %v1133 = vmax.f32 %v1132, %v954
      %v1134 = vmax.f32 %v1133, %v1055
      %v1135 = vmax.f32 %v759, %v858
      %v1136 = vmax.f32 %v1135, %v959
      %v1137 = vmax.f32 %v1136, %v1058
      %v1138 = vmax.f32 %v762, %v863
      %v1139 = vmax.f32 %v1138, %v962
      %v1140 = vmax.f32 %v1139, %v1063
      %v1141 = vmax.f32 %v767, %v866
      %v1142 = vmax.f32 %v1141, %v967
      %v1143 = vmax.f32 %v1142, %v1066
      %v1144 = vld [vmem:[%s2] sm:$0x1]
      %v1146 = vlaneseq
      %v1147 = vshrl.u32 %v1146, 7
      %v1148 = vsub.s32 0, %v1147
      %v1149 = vrot.slane %v1144, %v1148
      %v1151 = vadd.f32 %v1071, %v1149
      %v1152 = vadd.f32 %v1074, %v1149
      %v1153 = vadd.f32 %v1077, %v1149
      %v1154 = vadd.f32 %v1080, %v1149
      %v1155 = vadd.f32 %v1083, %v1149
      %v1156 = vadd.f32 %v1086, %v1149
      %v1157 = vadd.f32 %v1089, %v1149
      %v1158 = vadd.f32 %v1092, %v1149
      %v1159 = vadd.f32 %v1095, %v1149
      %v1160 = vadd.f32 %v1098, %v1149
      %v1161 = vadd.f32 %v1101, %v1149
      %v1162 = vadd.f32 %v1104, %v1149
      %v1163 = vadd.f32 %v1107, %v1149
      %v1164 = vadd.f32 %v1110, %v1149
      %v1165 = vadd.f32 %v1113, %v1149
      %v1166 = vadd.f32 %v1116, %v1149
      %v1167 = vadd.f32 %v1119, %v1149
      %v1168 = vadd.f32 %v1122, %v1149
      %v1169 = vadd.f32 %v1125, %v1149
      %v1170 = vadd.f32 %v1128, %v1149
      %v1171 = vadd.f32 %v1131, %v1149
      %v1172 = vadd.f32 %v1134, %v1149
      %v1173 = vadd.f32 %v1137, %v1149
      %v1174 = vadd.f32 %v1140, %v1149
      %v1175 = vadd.f32 %v1143, %v1149
      %v1176 = vmax.f32 %v1151, 0.0
      %v1177 = vmax.f32 %v1152, 0.0
      %v1178 = vmax.f32 %v1153, 0.0
      %v1179 = vmax.f32 %v1154, 0.0
      %v1180 = vmax.f32 %v1155, 0.0
      %v1181 = vmax.f32 %v1156, 0.0
      %v1182 = vmax.f32 %v1157, 0.0
      %v1183 = vmax.f32 %v1158, 0.0
      %v1184 = vmax.f32 %v1159, 0.0
      %v1185 = vmax.f32 %v1160, 0.0
      %v1186 = vmax.f32 %v1161, 0.0
      %v1187 = vmax.f32 %v1162, 0.0
      %v1188 = vmax.f32 %v1163, 0.0
      %v1189 = vmax.f32 %v1164, 0.0
      %v1190 = vmax.f32 %v1165, 0.0
      %v1191 = vmax.f32 %v1166, 0.0
      %v1192 = vmax.f32 %v1167, 0.0
      %v1193 = vmax.f32 %v1168, 0.0
      %v1194 = vmax.f32 %v1169, 0.0
      %v1195 = vmax.f32 %v1170, 0.0
      %v1196 = vmax.f32 %v1171, 0.0
      %v1197 = vmax.f32 %v1172, 0.0
      %v1198 = vmax.f32 %v1173, 0.0
      %v1199 = vmax.f32 %v1174, 0.0
      %v1200 = vmax.f32 %v1175, 0.0
      %v1201 = vpack.c.bf16 %v1177, %v1176
      %v1202 = vpack.c.bf16 %v1179, %v1178
      %v1203 = vpack.c.bf16 %v1181, %v1180
      %v1204 = vpack.c.bf16 %v1183, %v1182
      %v1205 = vpack.c.bf16 %v1185, %v1184
      %v1206 = vpack.c.bf16 %v1187, %v1186
      %v1207 = vpack.c.bf16 %v1189, %v1188
      %v1208 = vpack.c.bf16 %v1191, %v1190
      %v1209 = vpack.c.bf16 %v1193, %v1192
      %v1210 = vpack.c.bf16 %v1195, %v1194
      %v1211 = vpack.c.bf16 %v1197, %v1196
      %v1212 = vpack.c.bf16 %v1199, %v1198
      %v1213 = vpack.c.bf16 %v1200, %v1200
      %v1227 = vunpack.c.l.b16 %v1201
      %v1228 = vunpack.c.h.b16 %v1201
      %v1229 = vunpack.c.l.b16 %v1202
      %v1230 = vunpack.c.h.b16 %v1202
      %v1231 = vunpack.c.l.b16 %v1203
      %v1232 = vunpack.c.h.b16 %v1203
      %v1233 = vunpack.c.l.b16 %v1204
      %v1234 = vunpack.c.h.b16 %v1204
      %v1235 = vunpack.c.l.b16 %v1205
      %v1236 = vunpack.c.h.b16 %v1205
      %v1237 = vunpack.c.l.b16 %v1206
      %v1238 = vunpack.c.h.b16 %v1206
      %v1239 = vunpack.c.l.b16 %v1207
      %v1240 = vunpack.c.h.b16 %v1207
      %v1241 = vunpack.c.l.b16 %v1208
      %v1242 = vunpack.c.h.b16 %v1208
      %v1243 = vunpack.c.l.b16 %v1209
      %v1244 = vunpack.c.h.b16 %v1209
      %v1245 = vunpack.c.l.b16 %v1210
      %v1246 = vunpack.c.h.b16 %v1210
      %v1247 = vunpack.c.l.b16 %v1211
      %v1248 = vunpack.c.h.b16 %v1211
      %v1249 = vunpack.c.l.b16 %v1212
      %v1250 = vunpack.c.h.b16 %v1212
      %v1251 = vunpack.c.l.b16 %v1213
      %v1252 = vpack.c.b16 %v1227, %v1227
      %v1253 = vpack.c.b16 %v1228, %v1228
      %v1254 = vpack.c.b16 %v1229, %v1229
      %v1255 = vpack.c.b16 %v1230, %v1230
      %v1256 = vpack.c.b16 %v1231, %v1231
      %v1257 = vpack.c.b16 %v1232, %v1232
      %v1258 = vpack.c.b16 %v1233, %v1233
      %v1259 = vpack.c.b16 %v1234, %v1234
      %v1260 = vpack.c.b16 %v1235, %v1235
      %v1261 = vpack.c.b16 %v1236, %v1236
      %v1262 = vpack.c.b16 %v1237, %v1237
      %v1263 = vpack.c.b16 %v1238, %v1238
      %v1264 = vpack.c.b16 %v1239, %v1239
      %v1265 = vpack.c.b16 %v1240, %v1240
      %v1266 = vpack.c.b16 %v1241, %v1241
      %v1267 = vpack.c.b16 %v1242, %v1242
      %v1268 = vpack.c.b16 %v1243, %v1243
      %v1269 = vpack.c.b16 %v1244, %v1244
      %v1270 = vpack.c.b16 %v1245, %v1245
      %v1271 = vpack.c.b16 %v1246, %v1246
      %v1272 = vpack.c.b16 %v1247, %v1247
      %v1273 = vpack.c.b16 %v1248, %v1248
      %v1274 = vpack.c.b16 %v1249, %v1249
      %v1275 = vpack.c.b16 %v1250, %v1250
      %v1276 = vpack.c.b16 %v1251, %v1251
      %1302 = vst [vmem:[%s170] sm:$0xf] %v1252
      %1303 = vst [vmem:[%s170 + $0x4] sm:$0xf] %v1253
      %1304 = vst [vmem:[%s170 + $0x8] sm:$0xf] %v1254
      %1305 = vst [vmem:[%s170 + $0xc] sm:$0xf] %v1255
      %1306 = vst [vmem:[%s170 + $0x10] sm:$0xf] %v1256
      %1307 = vst [vmem:[%s170 + $0x14] sm:$0xf] %v1257
      %1308 = vst [vmem:[%s170 + $0x18] sm:$0xf] %v1258
      %1309 = vst [vmem:[%s170 + $0x1c] sm:$0xf] %v1259
      %1310 = vst [vmem:[%s170 + $0x20] sm:$0xf] %v1260
      %1311 = vst [vmem:[%s170 + $0x24] sm:$0xf] %v1261
      %1312 = vst [vmem:[%s170 + $0x28] sm:$0xf] %v1262
      %1313 = vst [vmem:[%s170 + $0x2c] sm:$0xf] %v1263
      %1314 = vst [vmem:[%s170 + $0x30] sm:$0xf] %v1264
      %1315 = vst [vmem:[%s170 + $0x34] sm:$0xf] %v1265
      %1316 = vst [vmem:[%s170 + $0x38] sm:$0xf] %v1266
      %1317 = vst [vmem:[%s170 + $0x3c] sm:$0xf] %v1267
      %1318 = vst [vmem:[%s170 + $0x40] sm:$0xf] %v1268
      %1319 = vst [vmem:[%s170 + $0x44] sm:$0xf] %v1269
      %1320 = vst [vmem:[%s170 + $0x48] sm:$0xf] %v1270
      %1321 = vst [vmem:[%s170 + $0x4c] sm:$0xf] %v1271
      %1322 = vst [vmem:[%s170 + $0x50] sm:$0xf] %v1272
      %1323 = vst [vmem:[%s170 + $0x54] sm:$0xf] %v1273
      %1324 = vst [vmem:[%s170 + $0x58] sm:$0xf] %v1274
      %1325 = vst [vmem:[%s170 + $0x5c] sm:$0xf] %v1275
      %1326 = vst [vmem:[%s170 + $0x60] sm:$0xf] %v1276
      %p1327 = scmp.lt.s32.totalorder %s14, 1
      %s1328 = scalar_select %p1327, %s14, 1
      %s1329 = smul.addr %s1328, 25
      %s1330 = smul.addr %s1329, 4
      %s1331 = scalar_lea.vmem %s3, %s1330
      // Predicated region
      $region33: #{simple_cnn_header_forward.3} parent=31 // pred_check
        %p1332 = pneg %p100
      $region34: #{simple_cnn_header_forward.3} parent=31 // pred_check_branch
        %1334 = sbr.rel (%p1332) target = $region36
      $region35: #{simple_cnn_header_forward.3} parent=31 // pred_region
        _
      $region36: #{simple_cnn_header_forward.3} parent=31 // pred_fallthru
        _
    $region32: #{simple_cnn_header_forward.3} parent=5 // pred_fallthru
      _
    %p1335 = scmp.le.s32.totalorder 2, %s9
    // Predicated region
    $region37: #{simple_cnn_header_forward.3} parent=5 // pred_check
      %p1336 = pneg %p1335
    $region38: #{simple_cnn_header_forward.3} parent=5 // pred_check_branch
      %1338 = sbr.rel (%p1336) target = $region40
    $region39: #{simple_cnn_header_forward.3} parent=5 // pred_region
      %s1339 = ssub.s32 %s9, 2
      // Predicated region
      $region41: #{simple_cnn_header_forward.3} parent=39 // pred_check
        %p1340 = pneg %p106
      $region42: #{simple_cnn_header_forward.3} parent=39 // pred_check_branch
        %1342 = sbr.rel (%p1340) target = $region44
      $region43: #{simple_cnn_header_forward.3} parent=39 // pred_region
        %p1343 = scmp.lt.s32.totalorder %s15, 1
        %s1344 = scalar_select %p1343, %s15, 1
        %s1345 = smul.addr %s1344, 25
        %s1346 = smul.addr %s1345, 4
        %s1347 = scalar_lea.vmem %s3, %s1346
      $region44: #{simple_cnn_header_forward.3} parent=39 // pred_fallthru
        _
    $region40: #{simple_cnn_header_forward.3} parent=5 // pred_fallthru
      _
  $region6: #{simple_cnn_header_forward.3} parent=0 // loop_footer
    %s13 = sadd.s32 1, %s9
  $region7: #{simple_cnn_header_forward.3} parent=0 // loop_footer_branch
    %8 = sbr.rel target = $region3
  $region8: #{simple_cnn_header_forward.3} parent=0 // loop_exit
    _

// kernel: simple_cnn_header_forward.4
$region0: #{simple_cnn_header_forward.4}
  #allocation0 [shape = 'u32[]', space=smem, size = 0x4, offset = 0x4, fixed_abs, tag = 'smem constant byte address 0x4 - core index']
  #allocation1 [shape = 'u32[144,128]{1,0:T(1,128)}', space=vmem, size = 0x12000, scoped, tag = 'internal scratch']
  %s0 = inlined_call_operand.vmem [shape: bf16[2,4,32,256], index: 0, kind: input, shape index: {}]
  %s1 = inlined_call_operand.vmem [shape: bf16[256,128], index: 1, kind: input, shape index: {}]
  %s2 = inlined_call_operand.vmem [shape: f32[1,128], index: 2, kind: input, shape index: {}]
  %s3 = inlined_call_operand.vmem [shape: f32[2,32,128], index: 3, kind: output, shape index: {}]
  %s4 = sld [smem:[#allocation0]]
  $region45: #{simple_cnn_header_forward.4} parent=0
    _
  %s6 = ssub.s32 1, %s4
  %s7 = scalar_select 0, %s6, %s4
  loop: start=0, step=1, limit=4
  $region2: #{simple_cnn_header_forward.4} parent=0 // loop_pre_header
    _
  $region3: #{simple_cnn_header_forward.4} parent=0 // loop_header
    %s9 = sphi 0, %s13
    %p10 = scmp.ge.s32.totalorder %s9, 4
    %s19 = sphi 0, %s21
    %s22 = sphi 0, %s19
    %s23 = sphi 0, %s22
    %s39 = sphi 0, %s23
    %s43 = sphi 0, %s43
    %s45 = sphi 0, %s43
    %s46 = sphi 0, %s45
    %s60 = sphi 0, %s46
    %s64 = sphi 0, %s64
    %s66 = sphi 0, %s64
    %s67 = sphi 0, %s66
    %s81 = sphi 0, %s67
    %s87 = sphi 0, %s89
    %s90 = sphi 0, %s87
    %s91 = sphi 0, %s90
    %s107 = sphi 0, %s91
  $region4: #{simple_cnn_header_forward.4} parent=0 // loop_header_branch
    %12 = sbr.rel (%p10) target = $region8
  $region5: #{simple_cnn_header_forward.4} parent=0 // loop_body
    %s14 = ssub.s32 %s9, 1
    %s15 = ssub.s32 %s9, 2
    %s16 = sadd.s32 %s9, 1
    %s17 = ssub.s32 %s9, %s16
    %p18 = scmp.eq.s32.totalorder %s17, 0
    %s20 = sadd.s32 %s19, 1
    %s21 = scalar_select %p18, %s19, %s20
    %p24 = pneg %p18
    %p25 = scmp.eq.s32.totalorder %s9, 1
    %p26 = por %p24, %p25
    %p27 = scmp.ne.s32.totalorder %s19, %s22
    %p28 = scmp.eq.s32.totalorder %s9, 0
    %p29 = por %p27, %p28
    %p30 = scmp.ne.s32.totalorder %s19, %s22
    %p31 = scmp.eq.s32.totalorder %s14, 1
    %p32 = por %p30, %p31
    %p33 = scmp.ne.s32.totalorder %s22, %s23
    %p34 = scmp.eq.s32.totalorder %s14, 0
    %p35 = por %p33, %p34
    %p36 = scmp.ne.s32.totalorder %s22, %s23
    %p37 = scmp.eq.s32.totalorder %s15, 1
    %p38 = por %p36, %p37
    %p40 = scmp.ne.s32.totalorder %s23, %s39
    %p41 = scmp.eq.s32.totalorder %s15, 0
    %p42 = por %p40, %p41
    %s44 = sadd.s32 %s43, 1
    %p47 = scmp.eq.s32.totalorder %s9, 1
    %p48 = scmp.ne.s32.totalorder %s43, %s45
    %p49 = scmp.eq.s32.totalorder %s9, 0
    %p50 = por %p48, %p49
    %p51 = scmp.ne.s32.totalorder %s43, %s45
    %p52 = scmp.eq.s32.totalorder %s14, 1
    %p53 = por %p51, %p52
    %p54 = scmp.ne.s32.totalorder %s45, %s46
    %p55 = scmp.eq.s32.totalorder %s14, 0
    %p56 = por %p54, %p55
    %p57 = scmp.ne.s32.totalorder %s45, %s46
    %p58 = scmp.eq.s32.totalorder %s15, 1
    %p59 = por %p57, %p58
    %p61 = scmp.ne.s32.totalorder %s46, %s60
    %p62 = scmp.eq.s32.totalorder %s15, 0
    %p63 = por %p61, %p62
    %s65 = sadd.s32 %s64, 1
    %p68 = scmp.eq.s32.totalorder %s9, 1
    %p69 = scmp.ne.s32.totalorder %s64, %s66
    %p70 = scmp.eq.s32.totalorder %s9, 0
    %p71 = por %p69, %p70
    %p72 = scmp.ne.s32.totalorder %s64, %s66
    %p73 = scmp.eq.s32.totalorder %s14, 1
    %p74 = por %p72, %p73
    %p75 = scmp.ne.s32.totalorder %s66, %s67
    %p76 = scmp.eq.s32.totalorder %s14, 0
    %p77 = por %p75, %p76
    %p78 = scmp.ne.s32.totalorder %s66, %s67
    %p79 = scmp.eq.s32.totalorder %s15, 1
    %p80 = por %p78, %p79
    %p82 = scmp.ne.s32.totalorder %s67, %s81
    %p83 = scmp.eq.s32.totalorder %s15, 0
    %p84 = por %p82, %p83
    %s85 = ssub.s32 %s9, %s16
    %p86 = scmp.eq.s32.totalorder %s85, 0
    %s88 = sadd.s32 %s87, 1
    %s89 = scalar_select %p86, %s87, %s88
    %p92 = pneg %p86
    %p93 = scmp.eq.s32.totalorder %s9, 1
    %p94 = por %p92, %p93
    %p95 = scmp.ne.s32.totalorder %s87, %s90
    %p96 = scmp.eq.s32.totalorder %s9, 0
    %p97 = por %p95, %p96
    %p98 = scmp.ne.s32.totalorder %s87, %s90
    %p99 = scmp.eq.s32.totalorder %s14, 1
    %p100 = por %p98, %p99
    %p101 = scmp.ne.s32.totalorder %s90, %s91
    %p102 = scmp.eq.s32.totalorder %s14, 0
    %p103 = por %p101, %p102
    %p104 = scmp.ne.s32.totalorder %s90, %s91
    %p105 = scmp.eq.s32.totalorder %s15, 1
    %p106 = por %p104, %p105
    %p108 = scmp.ne.s32.totalorder %s91, %s107
    %p109 = scmp.eq.s32.totalorder %s15, 0
    %p110 = por %p108, %p109
    %p111 = scmp.le.s32.totalorder 1, %s9
    %p112 = scmp.lt.s32.totalorder %s9, 3
    %p113 = pnand %p111, %p112
    %p114 = pneg %p113
    // Predicated region
    $region9: #{simple_cnn_header_forward.4} parent=5 // pred_check
      _
    $region10: #{simple_cnn_header_forward.4} parent=5 // pred_check_branch
      %116 = sbr.rel (%p113) target = $region12
    $region11: #{simple_cnn_header_forward.4} parent=5 // pred_region
      %s117 = ssub.s32 %s9, 1
      // Predicated region
      $region13: #{simple_cnn_header_forward.4} parent=11 // pred_check
        %p118 = pneg %p56
      $region14: #{simple_cnn_header_forward.4} parent=11 // pred_check_branch
        %120 = sbr.rel (%p118) target = $region16
      $region15: #{simple_cnn_header_forward.4} parent=11 // pred_region
        _
      $region16: #{simple_cnn_header_forward.4} parent=11 // pred_fallthru
        _
      // Predicated region
      $region17: #{simple_cnn_header_forward.4} parent=11 // pred_check
        %p121 = pneg %p77
      $region18: #{simple_cnn_header_forward.4} parent=11 // pred_check_branch
        %123 = sbr.rel (%p121) target = $region20
      $region19: #{simple_cnn_header_forward.4} parent=11 // pred_region
        _
      $region20: #{simple_cnn_header_forward.4} parent=11 // pred_fallthru
        _
    $region12: #{simple_cnn_header_forward.4} parent=5 // pred_fallthru
      _
    %p124 = scmp.lt.s32.totalorder %s9, 2
    // Predicated region
    $region21: #{simple_cnn_header_forward.4} parent=5 // pred_check
      %p125 = pneg %p124
    $region22: #{simple_cnn_header_forward.4} parent=5 // pred_check_branch
      %127 = sbr.rel (%p125) target = $region24
    $region23: #{simple_cnn_header_forward.4} parent=5 // pred_region
      // Predicated region
      $region25: #{simple_cnn_header_forward.4} parent=23 // pred_check
        %p128 = pneg %p29
      $region26: #{simple_cnn_header_forward.4} parent=23 // pred_check_branch
        %130 = sbr.rel (%p128) target = $region28
      $region27: #{simple_cnn_header_forward.4} parent=23 // pred_region
        %p131 = scmp.lt.s32.totalorder %s9, 1
        %s132 = scalar_select %p131, %s9, 1
        %s133 = smul.addr %s132, 32
        %s134 = smul.addr %s133, 4
        %s135 = scalar_lea.vmem %s0, %s134
      $region28: #{simple_cnn_header_forward.4} parent=23 // pred_fallthru
        _
    $region24: #{simple_cnn_header_forward.4} parent=5 // pred_fallthru
      _
    %p136 = scmp.le.s32.totalorder 1, %s9
    %p137 = scmp.lt.s32.totalorder %s9, 3
    %p138 = pnand %p136, %p137
    %p139 = pneg %p138
    // Predicated region
    $region29: #{simple_cnn_header_forward.4} parent=5 // pred_check
      _
    $region30: #{simple_cnn_header_forward.4} parent=5 // pred_check_branch
      %141 = sbr.rel (%p138) target = $region32
    $region31: #{simple_cnn_header_forward.4} parent=5 // pred_region
      %s142 = ssub.s32 %s9, 1
      %p143 = scmp.lt.s32.totalorder %s14, 1
      %s144 = scalar_select %p143, %s14, 1
      %s145 = smul.addr %s144, 32
      %s146 = smul.addr %s145, 4
      %s147 = scalar_lea.vmem %s0, %s146
      %p148 = pneg %p35
      %p149 = pneg %p32
      %p150 = pneg %p56
      %p151 = pneg %p53
      %p152 = pneg %p77
      %p153 = pneg %p74
      %p154 = pneg %p103
      %p155 = pneg %p100
      %p156 = scmp.lt.s32.totalorder %s14, 1
      %s157 = scalar_select %p156, %s14, 1
      %s158 = smul.addr %s157, 4
      %s159 = smul.addr %s158, 8
      %s160 = scalar_lea.vmem %s3, %s159
      %p161 = scmp.lt.s32.totalorder %s14, 1
      %s162 = scalar_select %p161, %s14, 1
      %s163 = smul.addr %s162, 32
      %s164 = smul.addr %s163, 4
      %s165 = scalar_lea.vmem %s0, %s164
      %p166 = scmp.lt.s32.totalorder %s14, 1
      %s167 = scalar_select %p166, %s14, 1
      %s168 = smul.addr %s167, 4
      %s169 = smul.addr %s168, 8
      %s170 = scalar_lea.vmem %s3, %s169
      %v172 = vld [vmem:[%s165] sm:$0xff]
      %v173 = vld [vmem:[%s165 + $0x8] sm:$0xff]
      %v174 = vld [vmem:[%s165 + $0x10] sm:$0xff]
      %v175 = vld [vmem:[%s165 + $0x18] sm:$0xff]
      %v176 = vld [vmem:[%s165 + $0x20] sm:$0xff]
      %v177 = vld [vmem:[%s165 + $0x28] sm:$0xff]
      %v178 = vld [vmem:[%s165 + $0x30] sm:$0xff]
      %v179 = vld [vmem:[%s165 + $0x38] sm:$0xff]
      %v180 = vld [vmem:[%s165 + $0x40] sm:$0xff]
      %v181 = vld [vmem:[%s165 + $0x48] sm:$0xff]
      %v182 = vld [vmem:[%s165 + $0x50] sm:$0xff]
      %v183 = vld [vmem:[%s165 + $0x58] sm:$0xff]
      %v184 = vld [vmem:[%s165 + $0x60] sm:$0xff]
      %v185 = vld [vmem:[%s165 + $0x68] sm:$0xff]
      %v186 = vld [vmem:[%s165 + $0x70] sm:$0xff]
      %v187 = vld [vmem:[%s165 + $0x78] sm:$0xff]
      %v188 = vld [vmem:[%s1] sm:$0xf]
      %v189 = vld [vmem:[%s1 + $0x4] sm:$0xf]
      %v190 = vld [vmem:[%s1 + $0x8] sm:$0xf]
      %v191 = vld [vmem:[%s1 + $0xc] sm:$0xf]
      %v192 = vld [vmem:[%s1 + $0x10] sm:$0xf]
      %v193 = vld [vmem:[%s1 + $0x14] sm:$0xf]
      %v194 = vld [vmem:[%s1 + $0x18] sm:$0xf]
      %v195 = vld [vmem:[%s1 + $0x1c] sm:$0xf]
      %v196 = vld [vmem:[%s1 + $0x20] sm:$0xf]
      %v197 = vld [vmem:[%s1 + $0x24] sm:$0xf]
      %v198 = vld [vmem:[%s1 + $0x28] sm:$0xf]
      %v199 = vld [vmem:[%s1 + $0x2c] sm:$0xf]
      %v200 = vld [vmem:[%s1 + $0x30] sm:$0xf]
      %v201 = vld [vmem:[%s1 + $0x34] sm:$0xf]
      %v202 = vld [vmem:[%s1 + $0x38] sm:$0xf]
      %v203 = vld [vmem:[%s1 + $0x3c] sm:$0xf]
      %v204 = vld [vmem:[%s1 + $0x40] sm:$0xf]
      %v205 = vld [vmem:[%s1 + $0x44] sm:$0xf]
      %v206 = vld [vmem:[%s1 + $0x48] sm:$0xf]
      %v207 = vld [vmem:[%s1 + $0x4c] sm:$0xf]
      %v208 = vld [vmem:[%s1 + $0x50] sm:$0xf]
      %v209 = vld [vmem:[%s1 + $0x54] sm:$0xf]
      %v210 = vld [vmem:[%s1 + $0x58] sm:$0xf]
      %v211 = vld [vmem:[%s1 + $0x5c] sm:$0xf]
      %v212 = vld [vmem:[%s1 + $0x60] sm:$0xf]
      %v213 = vld [vmem:[%s1 + $0x64] sm:$0xf]
      %v214 = vld [vmem:[%s1 + $0x68] sm:$0xf]
      %v215 = vld [vmem:[%s1 + $0x6c] sm:$0xf]
      %v216 = vld [vmem:[%s1 + $0x70] sm:$0xf]
      %v217 = vld [vmem:[%s1 + $0x74] sm:$0xf]
      %v218 = vld [vmem:[%s1 + $0x78] sm:$0xf]
      %v219 = vld [vmem:[%s1 + $0x7c] sm:$0xf]
      %v236 = vunpack.c.l.b16 %v172
      %v237 = vunpack.c.h.b16 %v172
      %v238 = vunpack.c.l.b16 %v173
      %v239 = vunpack.c.h.b16 %v173
      %v240 = vunpack.c.l.b16 %v174
      %v241 = vunpack.c.h.b16 %v174
      %v242 = vunpack.c.l.b16 %v175
      %v243 = vunpack.c.h.b16 %v175
      %v244 = vunpack.c.l.b16 %v176
      %v245 = vunpack.c.h.b16 %v176
      %v246 = vunpack.c.l.b16 %v177
      %v247 = vunpack.c.h.b16 %v177
      %v248 = vunpack.c.l.b16 %v178
      %v249 = vunpack.c.h.b16 %v178
      %v250 = vunpack.c.l.b16 %v179
      %v251 = vunpack.c.h.b16 %v179
      %v252 = vunpack.c.l.b16 %v180
      %v253 = vunpack.c.h.b16 %v180
      %v254 = vunpack.c.l.b16 %v181
      %v255 = vunpack.c.h.b16 %v181
      %v256 = vunpack.c.l.b16 %v182
      %v257 = vunpack.c.h.b16 %v182
      %v258 = vunpack.c.l.b16 %v183
      %v259 = vunpack.c.h.b16 %v183
      %v260 = vunpack.c.l.b16 %v184
      %v261 = vunpack.c.h.b16 %v184
      %v262 = vunpack.c.l.b16 %v185
      %v263 = vunpack.c.h.b16 %v185
      %v264 = vunpack.c.l.b16 %v186
      %v265 = vunpack.c.h.b16 %v186
      %v266 = vunpack.c.l.b16 %v187
      %v267 = vunpack.c.h.b16 %v187
      %v268 = vpack.c.b16 %v238, %v236
      %v269 = vpack.c.b16 %v239, %v237
      %v270 = vpack.c.b16 %v242, %v240
      %v271 = vpack.c.b16 %v243, %v241
      %v272 = vpack.c.b16 %v246, %v244
      %v273 = vpack.c.b16 %v247, %v245
      %v274 = vpack.c.b16 %v250, %v248
      %v275 = vpack.c.b16 %v251, %v249
      %v276 = vpack.c.b16 %v254, %v252
      %v277 = vpack.c.b16 %v255, %v253
      %v278 = vpack.c.b16 %v258, %v256
      %v279 = vpack.c.b16 %v259, %v257
      %v280 = vpack.c.b16 %v262, %v260
      %v281 = vpack.c.b16 %v263, %v261
      %v282 = vpack.c.b16 %v266, %v264
      %v283 = vpack.c.b16 %v267, %v265
      %v332 = vunpack.c.l.b16 %v188
      %v333 = vunpack.c.l.b16 %v189
      %v334 = vunpack.c.l.b16 %v190
      %v335 = vunpack.c.l.b16 %v191
      %v336 = vunpack.c.l.b16 %v192
      %v337 = vunpack.c.l.b16 %v193
      %v338 = vunpack.c.l.b16 %v194
      %v339 = vunpack.c.l.b16 %v195
      %v340 = vunpack.c.l.b16 %v196
      %v341 = vunpack.c.l.b16 %v197
      %v342 = vunpack.c.l.b16 %v198
      %v343 = vunpack.c.l.b16 %v199
      %v344 = vunpack.c.l.b16 %v200
      %v345 = vunpack.c.l.b16 %v201
      %v346 = vunpack.c.l.b16 %v202
      %v347 = vunpack.c.l.b16 %v203
      %v348 = vunpack.c.l.b16 %v204
      %v349 = vunpack.c.l.b16 %v205
      %v350 = vunpack.c.l.b16 %v206
      %v351 = vunpack.c.l.b16 %v207
      %v352 = vunpack.c.l.b16 %v208
      %v353 = vunpack.c.l.b16 %v209
      %v354 = vunpack.c.l.b16 %v210
      %v355 = vunpack.c.l.b16 %v211
      %v356 = vunpack.c.l.b16 %v212
      %v357 = vunpack.c.l.b16 %v213
      %v358 = vunpack.c.l.b16 %v214
      %v359 = vunpack.c.l.b16 %v215
      %v360 = vunpack.c.l.b16 %v216
      %v361 = vunpack.c.l.b16 %v217
      %v362 = vunpack.c.l.b16 %v218
      %v363 = vunpack.c.l.b16 %v219
      %v364 = vpack.c.b16 %v333, %v332
      %v365 = vpack.c.b16 %v335, %v334
      %v366 = vpack.c.b16 %v337, %v336
      %v367 = vpack.c.b16 %v339, %v338
      %v368 = vpack.c.b16 %v341, %v340
      %v369 = vpack.c.b16 %v343, %v342
      %v370 = vpack.c.b16 %v345, %v344
      %v371 = vpack.c.b16 %v347, %v346
      %v372 = vpack.c.b16 %v349, %v348
      %v373 = vpack.c.b16 %v351, %v350
      %v374 = vpack.c.b16 %v353, %v352
      %v375 = vpack.c.b16 %v355, %v354
      %v376 = vpack.c.b16 %v357, %v356
      %v377 = vpack.c.b16 %v359, %v358
      %v378 = vpack.c.b16 %v361, %v360
      %v379 = vpack.c.b16 %v363, %v362
      %396 = vmatprep.subr.bf16.mxu0 0
      %397 = vmatpush1.bf16.msra.mxu0 %v364
      %398 = vmatprep.subr.bf16.mxu0 0
      %399 = vmatpush1.bf16.msra.mxu0 %v365
      %400 = vmatprep.subr.bf16.mxu0 0
      %401 = vmatpush1.bf16.msra.mxu0 %v366
      %402 = vmatprep.subr.bf16.mxu0 0
      %403 = vmatpush1.bf16.msra.mxu0 %v367
      %404 = vmatprep.subr.bf16.mxu0 0
      %405 = vmatpush1.bf16.msra.mxu0 %v368
      %406 = vmatprep.subr.bf16.mxu0 0
      %407 = vmatpush1.bf16.msra.mxu0 %v369
      %408 = vmatprep.subr.bf16.mxu0 0
      %409 = vmatpush1.bf16.msra.mxu0 %v370
      %410 = vmatprep.subr.bf16.mxu0 0
      %411 = vmatpush1.bf16.msra.mxu0 %v371
      %412 = vmatprep.subr.bf16.mxu0 0
      %413 = vmatpush1.bf16.msra.mxu0 %v372
      %414 = vmatprep.subr.bf16.mxu0 0
      %415 = vmatpush1.bf16.msra.mxu0 %v373
      %416 = vmatprep.subr.bf16.mxu0 0
      %417 = vmatpush1.bf16.msra.mxu0 %v374
      %418 = vmatprep.subr.bf16.mxu0 0
      %419 = vmatpush1.bf16.msra.mxu0 %v375
      %420 = vmatprep.subr.bf16.mxu0 0
      %421 = vmatpush1.bf16.msra.mxu0 %v376
      %422 = vmatprep.subr.bf16.mxu0 0
      %423 = vmatpush1.bf16.msra.mxu0 %v377
      %424 = vmatprep.subr.bf16.mxu0 0
      %425 = vmatpush1.bf16.msra.mxu0 %v378
      %426 = vmatprep.subr.bf16.mxu0 0
      %427 = vmatpush1.bf16.msra.mxu0 %v379
      %428 = vmatprep.mubr.bf16.mxu0 %v269
      %429 = vmatmul.mubr.bf16.gmra.mrb[0].mxu0 %v268
      %v430 = vpop.f32.mrb[0].mxu0
      %v431 = vadd.f32 0.0, %v430
      %v432 = vpop.f32.mrb[0].mxu0
      %v433 = vpop.f32.mrb[0].mxu0
      %v434 = vadd.f32 0.0, %v433
      %v435 = vpop.f32.mrb[0].mxu0
      %436 = vmatprep.mubr.bf16.mxu0 %v271
      %437 = vmatmul.mubr.bf16.gmra.mrb[0].mxu0 %v270
      %v438 = vpop.f32.mrb[0].mxu0
      %v439 = vadd.f32 0.0, %v438
      %v440 = vpop.f32.mrb[0].mxu0
      %v441 = vpop.f32.mrb[0].mxu0
      %v442 = vadd.f32 0.0, %v441
      %v443 = vpop.f32.mrb[0].mxu0
      %444 = vmatprep.mubr.bf16.mxu0 %v273
      %445 = vmatmul.mubr.bf16.gmra.mrb[0].mxu0 %v272
      %v446 = vpop.f32.mrb[0].mxu0
      %v447 = vadd.f32 0.0, %v446
      %v448 = vpop.f32.mrb[0].mxu0
      %v449 = vpop.f32.mrb[0].mxu0
      %v450 = vadd.f32 0.0, %v449
      %v451 = vpop.f32.mrb[0].mxu0
      %452 = vmatprep.mubr.bf16.mxu0 %v275
      %453 = vmatmul.mubr.bf16.gmra.mrb[0].mxu0 %v274
      %v454 = vpop.f32.mrb[0].mxu0
      %v455 = vadd.f32 0.0, %v454
      %v456 = vpop.f32.mrb[0].mxu0
      %v457 = vpop.f32.mrb[0].mxu0
      %v458 = vadd.f32 0.0, %v457
      %v459 = vpop.f32.mrb[0].mxu0
      %460 = vmatprep.mubr.bf16.mxu0 %v277
      %461 = vmatmul.mubr.bf16.gmra.mrb[0].mxu0 %v276
      %v462 = vpop.f32.mrb[0].mxu0
      %v463 = vadd.f32 0.0, %v462
      %v464 = vpop.f32.mrb[0].mxu0
      %v465 = vpop.f32.mrb[0].mxu0
      %v466 = vadd.f32 0.0, %v465
      %v467 = vpop.f32.mrb[0].mxu0
      %468 = vmatprep.mubr.bf16.mxu0 %v279
      %469 = vmatmul.mubr.bf16.gmra.mrb[0].mxu0 %v278
      %v470 = vpop.f32.mrb[0].mxu0
      %v471 = vadd.f32 0.0, %v470
      %v472 = vpop.f32.mrb[0].mxu0
      %v473 = vpop.f32.mrb[0].mxu0
      %v474 = vadd.f32 0.0, %v473
      %v475 = vpop.f32.mrb[0].mxu0
      %476 = vmatprep.mubr.bf16.mxu0 %v281
      %477 = vmatmul.mubr.bf16.gmra.mrb[0].mxu0 %v280
      %v478 = vpop.f32.mrb[0].mxu0
      %v479 = vadd.f32 0.0, %v478
      %v480 = vpop.f32.mrb[0].mxu0
      %v481 = vpop.f32.mrb[0].mxu0
      %v482 = vadd.f32 0.0, %v481
      %v483 = vpop.f32.mrb[0].mxu0
      %484 = vmatprep.mubr.bf16.mxu0 %v283
      %485 = vmatmul.mubr.bf16.gmra.mrb[0].mxu0 %v282
      %v486 = vpop.f32.mrb[0].mxu0
      %v487 = vadd.f32 0.0, %v486
      %v488 = vpop.f32.mrb[0].mxu0
      %v489 = vpop.f32.mrb[0].mxu0
      %v490 = vadd.f32 0.0, %v489
      %v491 = vpop.f32.mrb[0].mxu0
      %492 = vdwg.mxu0
      %v493 = vmax.f32 %v431, %v447
      %v494 = vmax.f32 %v493, %v463
      %v495 = vmax.f32 %v494, %v479
      %v496 = vmax.f32 %v434, %v450
      %v497 = vmax.f32 %v496, %v466
      %v498 = vmax.f32 %v497, %v482
      %v499 = vmax.f32 %v439, %v455
      %v500 = vmax.f32 %v499, %v471
      %v501 = vmax.f32 %v500, %v487
      %v502 = vmax.f32 %v442, %v458
      %v503 = vmax.f32 %v502, %v474
      %v504 = vmax.f32 %v503, %v490
      %v505 = vld [vmem:[%s2] sm:$0x1]
      %v507 = vlaneseq
      %v508 = vshrl.u32 %v507, 7
      %v509 = vsub.s32 0, %v508
      %v510 = vrot.slane %v505, %v509
      %v512 = vadd.f32 %v495, %v510
      %v513 = vadd.f32 %v498, %v510
      %v514 = vadd.f32 %v501, %v510
      %v515 = vadd.f32 %v504, %v510
      %v516 = vmax.f32 %v512, 0.0
      %v517 = vmax.f32 %v513, 0.0
      %v518 = vmax.f32 %v514, 0.0
      %v519 = vmax.f32 %v515, 0.0
      %520 = vst [vmem:[%s170] sm:$0xff] %v516
      %521 = vst [vmem:[%s170 + $0x8] sm:$0xff] %v517
      %522 = vst [vmem:[%s170 + $0x10] sm:$0xff] %v518
      %523 = vst [vmem:[%s170 + $0x18] sm:$0xff] %v519
      %p524 = scmp.lt.s32.totalorder %s14, 1
      %s525 = scalar_select %p524, %s14, 1
      %s526 = smul.addr %s525, 4
      %s527 = smul.addr %s526, 8
      %s528 = scalar_lea.vmem %s3, %s527
      // Predicated region
      $region33: #{simple_cnn_header_forward.4} parent=31 // pred_check
        %p529 = pneg %p100
      $region34: #{simple_cnn_header_forward.4} parent=31 // pred_check_branch
        %531 = sbr.rel (%p529) target = $region36
      $region35: #{simple_cnn_header_forward.4} parent=31 // pred_region
        _
      $region36: #{simple_cnn_header_forward.4} parent=31 // pred_fallthru
        _
    $region32: #{simple_cnn_header_forward.4} parent=5 // pred_fallthru
      _
    %p532 = scmp.le.s32.totalorder 2, %s9
    // Predicated region
    $region37: #{simple_cnn_header_forward.4} parent=5 // pred_check
      %p533 = pneg %p532
    $region38: #{simple_cnn_header_forward.4} parent=5 // pred_check_branch
      %535 = sbr.rel (%p533) target = $region40
    $region39: #{simple_cnn_header_forward.4} parent=5 // pred_region
      %s536 = ssub.s32 %s9, 2
      // Predicated region
      $region41: #{simple_cnn_header_forward.4} parent=39 // pred_check
        %p537 = pneg %p106
      $region42: #{simple_cnn_header_forward.4} parent=39 // pred_check_branch
        %539 = sbr.rel (%p537) target = $region44
      $region43: #{simple_cnn_header_forward.4} parent=39 // pred_region
        %p540 = scmp.lt.s32.totalorder %s15, 1
        %s541 = scalar_select %p540, %s15, 1
        %s542 = smul.addr %s541, 4
        %s543 = smul.addr %s542, 8
        %s544 = scalar_lea.vmem %s3, %s543
      $region44: #{simple_cnn_header_forward.4} parent=39 // pred_fallthru
        _
    $region40: #{simple_cnn_header_forward.4} parent=5 // pred_fallthru
      _
  $region6: #{simple_cnn_header_forward.4} parent=0 // loop_footer
    %s13 = sadd.s32 1, %s9
  $region7: #{simple_cnn_header_forward.4} parent=0 // loop_footer_branch
    %8 = sbr.rel target = $region3
  $region8: #{simple_cnn_header_forward.4} parent=0 // loop_exit
    _

// kernel: simple_cnn_header_forward.5
$region0: #{simple_cnn_header_forward.5}
  #allocation0 [shape = 'u32[]', space=smem, size = 0x4, offset = 0x4, fixed_abs, tag = 'smem constant byte address 0x4 - core index']
  #allocation1 [shape = 'u32[144,128]{1,0:T(1,128)}', space=vmem, size = 0x12000, scoped, tag = 'internal scratch']
  %s0 = inlined_call_operand.vmem [shape: f32[8,512], index: 0, kind: input, shape index: {}]
  %s1 = inlined_call_operand.vmem [shape: f32[512,128], index: 1, kind: input, shape index: {}]
  %s2 = inlined_call_operand.vmem [shape: f32[1,128], index: 2, kind: input, shape index: {}]
  %s3 = inlined_call_operand.vmem [shape: f32[128,128], index: 3, kind: input, shape index: {}]
  %s4 = inlined_call_operand.vmem [shape: f32[1,128], index: 4, kind: input, shape index: {}]
  %s5 = inlined_call_operand.vmem [shape: f32[8,128], index: 5, kind: output, shape index: {}]
  %s6 = sld [smem:[#allocation0]]
  $region30: #{simple_cnn_header_forward.5} parent=0
    _
  %s8 = ssub.s32 1, %s6
  %s9 = scalar_select 0, %s8, %s6
  // Predicated region
  $region2: #{simple_cnn_header_forward.5} parent=0 // pred_check
    _
  $region3: #{simple_cnn_header_forward.5} parent=0 // pred_check_branch
    %11 = sbr.rel (0) target = $region5
  $region4: #{simple_cnn_header_forward.5} parent=0 // pred_region
    _
  $region5: #{simple_cnn_header_forward.5} parent=0 // pred_fallthru
    _
  // Predicated region
  $region6: #{simple_cnn_header_forward.5} parent=0 // pred_check
    _
  $region7: #{simple_cnn_header_forward.5} parent=0 // pred_check_branch
    %13 = sbr.rel (0) target = $region9
  $region8: #{simple_cnn_header_forward.5} parent=0 // pred_region
    _
  $region9: #{simple_cnn_header_forward.5} parent=0 // pred_fallthru
    _
  // Predicated region
  $region10: #{simple_cnn_header_forward.5} parent=0 // pred_check
    _
  $region11: #{simple_cnn_header_forward.5} parent=0 // pred_check_branch
    %15 = sbr.rel (0) target = $region13
  $region12: #{simple_cnn_header_forward.5} parent=0 // pred_region
    _
  $region13: #{simple_cnn_header_forward.5} parent=0 // pred_fallthru
    _
  // Predicated region
  $region14: #{simple_cnn_header_forward.5} parent=0 // pred_check
    _
  $region15: #{simple_cnn_header_forward.5} parent=0 // pred_check_branch
    %17 = sbr.rel (0) target = $region17
  $region16: #{simple_cnn_header_forward.5} parent=0 // pred_region
    _
  $region17: #{simple_cnn_header_forward.5} parent=0 // pred_fallthru
    _
  // Predicated region
  $region18: #{simple_cnn_header_forward.5} parent=0 // pred_check
    _
  $region19: #{simple_cnn_header_forward.5} parent=0 // pred_check_branch
    %19 = sbr.rel (0) target = $region21
  $region20: #{simple_cnn_header_forward.5} parent=0 // pred_region
    _
  $region21: #{simple_cnn_header_forward.5} parent=0 // pred_fallthru
    _
  %v20 = vld [vmem:[%s0] sm:$0xff]
  %v21 = vld [vmem:[%s0 + $0x8] sm:$0xff]
  %v22 = vld [vmem:[%s0 + $0x10] sm:$0xff]
  %v23 = vld [vmem:[%s0 + $0x18] sm:$0xff]
  %v24 = vld [vmem:[%s1] sm:$0xff]
  %v25 = vld [vmem:[%s1 + $0x8] sm:$0xff]
  %v26 = vld [vmem:[%s1 + $0x10] sm:$0xff]
  %v27 = vld [vmem:[%s1 + $0x18] sm:$0xff]
  %v28 = vld [vmem:[%s1 + $0x20] sm:$0xff]
  %v29 = vld [vmem:[%s1 + $0x28] sm:$0xff]
  %v30 = vld [vmem:[%s1 + $0x30] sm:$0xff]
  %v31 = vld [vmem:[%s1 + $0x38] sm:$0xff]
  %v32 = vld [vmem:[%s1 + $0x40] sm:$0xff]
  %v33 = vld [vmem:[%s1 + $0x48] sm:$0xff]
  %v34 = vld [vmem:[%s1 + $0x50] sm:$0xff]
  %v35 = vld [vmem:[%s1 + $0x58] sm:$0xff]
  %v36 = vld [vmem:[%s1 + $0x60] sm:$0xff]
  %v37 = vld [vmem:[%s1 + $0x68] sm:$0xff]
  %v38 = vld [vmem:[%s1 + $0x70] sm:$0xff]
  %v39 = vld [vmem:[%s1 + $0x78] sm:$0xff]
  %v40 = vld [vmem:[%s1 + $0x80] sm:$0xff]
  %v41 = vld [vmem:[%s1 + $0x88] sm:$0xff]
  %v42 = vld [vmem:[%s1 + $0x90] sm:$0xff]
  %v43 = vld [vmem:[%s1 + $0x98] sm:$0xff]
  %v44 = vld [vmem:[%s1 + $0xa0] sm:$0xff]
  %v45 = vld [vmem:[%s1 + $0xa8] sm:$0xff]
  %v46 = vld [vmem:[%s1 + $0xb0] sm:$0xff]
  %v47 = vld [vmem:[%s1 + $0xb8] sm:$0xff]
  %v48 = vld [vmem:[%s1 + $0xc0] sm:$0xff]
  %v49 = vld [vmem:[%s1 + $0xc8] sm:$0xff]
  %v50 = vld [vmem:[%s1 + $0xd0] sm:$0xff]
  %v51 = vld [vmem:[%s1 + $0xd8] sm:$0xff]
  %v52 = vld [vmem:[%s1 + $0xe0] sm:$0xff]
  %v53 = vld [vmem:[%s1 + $0xe8] sm:$0xff]
  %v54 = vld [vmem:[%s1 + $0xf0] sm:$0xff]
  %v55 = vld [vmem:[%s1 + $0xf8] sm:$0xff]
  %v56 = vld [vmem:[%s1 + $0x100] sm:$0xff]
  %v57 = vld [vmem:[%s1 + $0x108] sm:$0xff]
  %v58 = vld [vmem:[%s1 + $0x110] sm:$0xff]
  %v59 = vld [vmem:[%s1 + $0x118] sm:$0xff]
  %v60 = vld [vmem:[%s1 + $0x120] sm:$0xff]
  %v61 = vld [vmem:[%s1 + $0x128] sm:$0xff]
  %v62 = vld [vmem:[%s1 + $0x130] sm:$0xff]
  %v63 = vld [vmem:[%s1 + $0x138] sm:$0xff]
  %v64 = vld [vmem:[%s1 + $0x140] sm:$0xff]
  %v65 = vld [vmem:[%s1 + $0x148] sm:$0xff]
  %v66 = vld [vmem:[%s1 + $0x150] sm:$0xff]
  %v67 = vld [vmem:[%s1 + $0x158] sm:$0xff]
  %v68 = vld [vmem:[%s1 + $0x160] sm:$0xff]
  %v69 = vld [vmem:[%s1 + $0x168] sm:$0xff]
  %v70 = vld [vmem:[%s1 + $0x170] sm:$0xff]
  %v71 = vld [vmem:[%s1 + $0x178] sm:$0xff]
  %v72 = vld [vmem:[%s1 + $0x180] sm:$0xff]
  %v73 = vld [vmem:[%s1 + $0x188] sm:$0xff]
  %v74 = vld [vmem:[%s1 + $0x190] sm:$0xff]
  %v75 = vld [vmem:[%s1 + $0x198] sm:$0xff]
  %v76 = vld [vmem:[%s1 + $0x1a0] sm:$0xff]
  %v77 = vld [vmem:[%s1 + $0x1a8] sm:$0xff]
  %v78 = vld [vmem:[%s1 + $0x1b0] sm:$0xff]
  %v79 = vld [vmem:[%s1 + $0x1b8] sm:$0xff]
  %v80 = vld [vmem:[%s1 + $0x1c0] sm:$0xff]
  %v81 = vld [vmem:[%s1 + $0x1c8] sm:$0xff]
  %v82 = vld [vmem:[%s1 + $0x1d0] sm:$0xff]
  %v83 = vld [vmem:[%s1 + $0x1d8] sm:$0xff]
  %v84 = vld [vmem:[%s1 + $0x1e0] sm:$0xff]
  %v85 = vld [vmem:[%s1 + $0x1e8] sm:$0xff]
  %v86 = vld [vmem:[%s1 + $0x1f0] sm:$0xff]
  %v87 = vld [vmem:[%s1 + $0x1f8] sm:$0xff]
  %v88 = vld [vmem:[%s2] sm:$0x1]
  %v90 = vlaneseq
  %v91 = vshrl.u32 %v90, 7
  %v92 = vsub.s32 0, %v91
  %v93 = vrot.slane %v88, %v92
  %95 = vmatprep.subr.mxu0 0.0
  %96 = vmatpush1.msra.mxu0 %v24
  %97 = vmatprep.subr.mxu0 0.0
  %98 = vmatpush1.msra.mxu0 %v25
  %99 = vmatprep.subr.mxu0 0.0
  %100 = vmatpush1.msra.mxu0 %v26
  %101 = vmatprep.subr.mxu0 0.0
  %102 = vmatpush1.msra.mxu0 %v27
  %103 = vmatprep.subr.mxu0 0.0
  %104 = vmatpush1.msra.mxu0 %v28
  %105 = vmatprep.subr.mxu0 0.0
  %106 = vmatpush1.msra.mxu0 %v29
  %107 = vmatprep.subr.mxu0 0.0
  %108 = vmatpush1.msra.mxu0 %v30
  %109 = vmatprep.subr.mxu0 0.0
  %110 = vmatpush1.msra.mxu0 %v31
  %111 = vmatprep.subr.mxu0 0.0
  %112 = vmatpush1.msra.mxu0 %v32
  %113 = vmatprep.subr.mxu0 0.0
  %114 = vmatpush1.msra.mxu0 %v33
  %115 = vmatprep.subr.mxu0 0.0
  %116 = vmatpush1.msra.mxu0 %v34
  %117 = vmatprep.subr.mxu0 0.0
  %118 = vmatpush1.msra.mxu0 %v35
  %119 = vmatprep.subr.mxu0 0.0
  %120 = vmatpush1.msra.mxu0 %v36
  %121 = vmatprep.subr.mxu0 0.0
  %122 = vmatpush1.msra.mxu0 %v37
  %123 = vmatprep.subr.mxu0 0.0
  %124 = vmatpush1.msra.mxu0 %v38
  %125 = vmatprep.subr.mxu0 0.0
  %126 = vmatpush1.msra.mxu0 %v39
  %127 = vmatprep.subr.mxu0 0.0
  %128 = vmatpush1.msra.mxu0 %v40
  %129 = vmatprep.subr.mxu0 0.0
  %130 = vmatpush1.msra.mxu0 %v41
  %131 = vmatprep.subr.mxu0 0.0
  %132 = vmatpush1.msra.mxu0 %v42
  %133 = vmatprep.subr.mxu0 0.0
  %134 = vmatpush1.msra.mxu0 %v43
  %135 = vmatprep.subr.mxu0 0.0
  %136 = vmatpush1.msra.mxu0 %v44
  %137 = vmatprep.subr.mxu0 0.0
  %138 = vmatpush1.msra.mxu0 %v45
  %139 = vmatprep.subr.mxu0 0.0
  %140 = vmatpush1.msra.mxu0 %v46
  %141 = vmatprep.subr.mxu0 0.0
  %142 = vmatpush1.msra.mxu0 %v47
  %143 = vmatprep.subr.mxu0 0.0
  %144 = vmatpush1.msra.mxu0 %v48
  %145 = vmatprep.subr.mxu0 0.0
  %146 = vmatpush1.msra.mxu0 %v49
  %147 = vmatprep.subr.mxu0 0.0
  %148 = vmatpush1.msra.mxu0 %v50
  %149 = vmatprep.subr.mxu0 0.0
  %150 = vmatpush1.msra.mxu0 %v51
  %151 = vmatprep.subr.mxu0 0.0
  %152 = vmatpush1.msra.mxu0 %v52
  %153 = vmatprep.subr.mxu0 0.0
  %154 = vmatpush1.msra.mxu0 %v53
  %155 = vmatprep.subr.mxu0 0.0
  %156 = vmatpush1.msra.mxu0 %v54
  %157 = vmatprep.subr.mxu0 0.0
  %158 = vmatpush1.msra.mxu0 %v55
  %159 = vmatprep.mubr.f32.mxu0 %v21
  %160 = vmatmul.mubr.f32.gmra.mrb[0].mxu0 %v20
  %v161 = vpop.f32.mrb[0].mxu0
  %v162 = vadd.f32 %v93, %v161
  %v163 = vpop.f32.mrb[0].mxu0
  %164 = vdwg.mxu0
  %165 = vmatprep.subr.mxu0 0.0
  %166 = vmatpush1.msra.mxu0 %v56
  %167 = vmatprep.subr.mxu0 0.0
  %168 = vmatpush1.msra.mxu0 %v57
  %169 = vmatprep.subr.mxu0 0.0
  %170 = vmatpush1.msra.mxu0 %v58
  %171 = vmatprep.subr.mxu0 0.0
  %172 = vmatpush1.msra.mxu0 %v59
  %173 = vmatprep.subr.mxu0 0.0
  %174 = vmatpush1.msra.mxu0 %v60
  %175 = vmatprep.subr.mxu0 0.0
  %176 = vmatpush1.msra.mxu0 %v61
  %177 = vmatprep.subr.mxu0 0.0
  %178 = vmatpush1.msra.mxu0 %v62
  %179 = vmatprep.subr.mxu0 0.0
  %180 = vmatpush1.msra.mxu0 %v63
  %181 = vmatprep.subr.mxu0 0.0
  %182 = vmatpush1.msra.mxu0 %v64
  %183 = vmatprep.subr.mxu0 0.0
  %184 = vmatpush1.msra.mxu0 %v65
  %185 = vmatprep.subr.mxu0 0.0
  %186 = vmatpush1.msra.mxu0 %v66
  %187 = vmatprep.subr.mxu0 0.0
  %188 = vmatpush1.msra.mxu0 %v67
  %189 = vmatprep.subr.mxu0 0.0
  %190 = vmatpush1.msra.mxu0 %v68
  %191 = vmatprep.subr.mxu0 0.0
  %192 = vmatpush1.msra.mxu0 %v69
  %193 = vmatprep.subr.mxu0 0.0
  %194 = vmatpush1.msra.mxu0 %v70
  %195 = vmatprep.subr.mxu0 0.0
  %196 = vmatpush1.msra.mxu0 %v71
  %197 = vmatprep.subr.mxu0 0.0
  %198 = vmatpush1.msra.mxu0 %v72
  %199 = vmatprep.subr.mxu0 0.0
  %200 = vmatpush1.msra.mxu0 %v73
  %201 = vmatprep.subr.mxu0 0.0
  %202 = vmatpush1.msra.mxu0 %v74
  %203 = vmatprep.subr.mxu0 0.0
  %204 = vmatpush1.msra.mxu0 %v75
  %205 = vmatprep.subr.mxu0 0.0
  %206 = vmatpush1.msra.mxu0 %v76
  %207 = vmatprep.subr.mxu0 0.0
  %208 = vmatpush1.msra.mxu0 %v77
  %209 = vmatprep.subr.mxu0 0.0
  %210 = vmatpush1.msra.mxu0 %v78
  %211 = vmatprep.subr.mxu0 0.0
  %212 = vmatpush1.msra.mxu0 %v79
  %213 = vmatprep.subr.mxu0 0.0
  %214 = vmatpush1.msra.mxu0 %v80
  %215 = vmatprep.subr.mxu0 0.0
  %216 = vmatpush1.msra.mxu0 %v81
  %217 = vmatprep.subr.mxu0 0.0
  %218 = vmatpush1.msra.mxu0 %v82
  %219 = vmatprep.subr.mxu0 0.0
  %220 = vmatpush1.msra.mxu0 %v83
  %221 = vmatprep.subr.mxu0 0.0
  %222 = vmatpush1.msra.mxu0 %v84
  %223 = vmatprep.subr.mxu0 0.0
  %224 = vmatpush1.msra.mxu0 %v85
  %225 = vmatprep.subr.mxu0 0.0
  %226 = vmatpush1.msra.mxu0 %v86
  %227 = vmatprep.subr.mxu0 0.0
  %228 = vmatpush1.msra.mxu0 %v87
  %229 = vmatprep.mubr.f32.mxu0 %v23
  %230 = vmatmul.mubr.f32.gmra.mrb[0].mxu0 %v22
  %v231 = vpop.f32.mrb[0].mxu0
  %v232 = vadd.f32 %v162, %v231
  %v233 = vpop.f32.mrb[0].mxu0
  %234 = vdwg.mxu0
  %v235 = vmax.f32 %v232, 0.0
  %v236 = vld [vmem:[%s3] sm:$0xff]
  %v237 = vld [vmem:[%s3 + $0x8] sm:$0xff]
  %v238 = vld [vmem:[%s3 + $0x10] sm:$0xff]
  %v239 = vld [vmem:[%s3 + $0x18] sm:$0xff]
  %v240 = vld [vmem:[%s3 + $0x20] sm:$0xff]
  %v241 = vld [vmem:[%s3 + $0x28] sm:$0xff]
  %v242 = vld [vmem:[%s3 + $0x30] sm:$0xff]
  %v243 = vld [vmem:[%s3 + $0x38] sm:$0xff]
  %v244 = vld [vmem:[%s3 + $0x40] sm:$0xff]
  %v245 = vld [vmem:[%s3 + $0x48] sm:$0xff]
  %v246 = vld [vmem:[%s3 + $0x50] sm:$0xff]
  %v247 = vld [vmem:[%s3 + $0x58] sm:$0xff]
  %v248 = vld [vmem:[%s3 + $0x60] sm:$0xff]
  %v249 = vld [vmem:[%s3 + $0x68] sm:$0xff]
  %v250 = vld [vmem:[%s3 + $0x70] sm:$0xff]
  %v251 = vld [vmem:[%s3 + $0x78] sm:$0xff]
  %v252 = vld [vmem:[%s4] sm:$0x1]
  %v254 = vlaneseq
  %v255 = vshrl.u32 %v254, 7
  %v256 = vsub.s32 0, %v255
  %v257 = vrot.slane %v252, %v256
  %259 = vmatprep.subr.mxu0 0.0
  %260 = vmatpush1.msra.mxu0 %v236
  %261 = vmatprep.subr.mxu0 0.0
  %262 = vmatpush1.msra.mxu0 %v237
  %263 = vmatprep.subr.mxu0 0.0
  %264 = vmatpush1.msra.mxu0 %v238
  %265 = vmatprep.subr.mxu0 0.0
  %266 = vmatpush1.msra.mxu0 %v239
  %267 = vmatprep.subr.mxu0 0.0
  %268 = vmatpush1.msra.mxu0 %v240
  %269 = vmatprep.subr.mxu0 0.0
  %270 = vmatpush1.msra.mxu0 %v241
  %271 = vmatprep.subr.mxu0 0.0
  %272 = vmatpush1.msra.mxu0 %v242
  %273 = vmatprep.subr.mxu0 0.0
  %274 = vmatpush1.msra.mxu0 %v243
  %275 = vmatprep.subr.mxu0 0.0
  %276 = vmatpush1.msra.mxu0 %v244
  %277 = vmatprep.subr.mxu0 0.0
  %278 = vmatpush1.msra.mxu0 %v245
  %279 = vmatprep.subr.mxu0 0.0
  %280 = vmatpush1.msra.mxu0 %v246
  %281 = vmatprep.subr.mxu0 0.0
  %282 = vmatpush1.msra.mxu0 %v247
  %283 = vmatprep.subr.mxu0 0.0
  %284 = vmatpush1.msra.mxu0 %v248
  %285 = vmatprep.subr.mxu0 0.0
  %286 = vmatpush1.msra.mxu0 %v249
  %287 = vmatprep.subr.mxu0 0.0
  %288 = vmatpush1.msra.mxu0 %v250
  %289 = vmatprep.subr.mxu0 0.0
  %290 = vmatpush1.msra.mxu0 %v251
  %291 = vmatprep.subr.mxu0 0.0
  %292 = vmatpush1.msra.mxu0 0.0
  %293 = vmatprep.subr.mxu0 0.0
  %294 = vmatpush1.msra.mxu0 0.0
  %295 = vmatprep.subr.mxu0 0.0
  %296 = vmatpush1.msra.mxu0 0.0
  %297 = vmatprep.subr.mxu0 0.0
  %298 = vmatpush1.msra.mxu0 0.0
  %299 = vmatprep.subr.mxu0 0.0
  %300 = vmatpush1.msra.mxu0 0.0
  %301 = vmatprep.subr.mxu0 0.0
  %302 = vmatpush1.msra.mxu0 0.0
  %303 = vmatprep.subr.mxu0 0.0
  %304 = vmatpush1.msra.mxu0 0.0
  %305 = vmatprep.subr.mxu0 0.0
  %306 = vmatpush1.msra.mxu0 0.0
  %307 = vmatprep.subr.mxu0 0.0
  %308 = vmatpush1.msra.mxu0 0.0
  %309 = vmatprep.subr.mxu0 0.0
  %310 = vmatpush1.msra.mxu0 0.0
  %311 = vmatprep.subr.mxu0 0.0
  %312 = vmatpush1.msra.mxu0 0.0
  %313 = vmatprep.subr.mxu0 0.0
  %314 = vmatpush1.msra.mxu0 0.0
  %315 = vmatprep.subr.mxu0 0.0
  %316 = vmatpush1.msra.mxu0 0.0
  %317 = vmatprep.subr.mxu0 0.0
  %318 = vmatpush1.msra.mxu0 0.0
  %319 = vmatprep.subr.mxu0 0.0
  %320 = vmatpush1.msra.mxu0 0.0
  %321 = vmatprep.subr.mxu0 0.0
  %322 = vmatpush1.msra.mxu0 0.0
  %323 = vmatprep.mubr.f32.mxu0 0.0
  %324 = vmatmul.mubr.f32.gmra.mrb[0].mxu0 %v235
  %v325 = vpop.f32.mrb[0].mxu0
  %v326 = vadd.f32 %v257, %v325
  %v327 = vpop.f32.mrb[0].mxu0
  %328 = vdwg.mxu0
  %v329 = vmax.f32 %v326, 0.0
  %330 = vst [vmem:[%s5] sm:$0xff] %v329
  // Predicated region
  $region22: #{simple_cnn_header_forward.5} parent=0 // pred_check
    _
  $region23: #{simple_cnn_header_forward.5} parent=0 // pred_check_branch
    %332 = sbr.rel (0) target = $region25
  $region24: #{simple_cnn_header_forward.5} parent=0 // pred_region
    _
  $region25: #{simple_cnn_header_forward.5} parent=0 // pred_fallthru
    _
  // Predicated region
  $region26: #{simple_cnn_header_forward.5} parent=0 // pred_check
    _
  $region27: #{simple_cnn_header_forward.5} parent=0 // pred_check_branch
    %334 = sbr.rel (0) target = $region29
  $region28: #{simple_cnn_header_forward.5} parent=0 // pred_region
    _
  $region29: #{simple_cnn_header_forward.5} parent=0 // pred_fallthru
    _

</llo_original>
